<compile_context>
chip_gen: v7x
topology: tpu7x:2x2x1
jax: 0.10.0
libtpu: 0.0.40
codegen_flags: <defaults>
</compile_context>

<pallas_src>
import math
import functools

import jax
import jax.numpy as jnp
import numpy as np
from jax import lax
from jax.experimental import pallas as pl
from jax.experimental.pallas import tpu as pltpu


def _attention_layer_kernel(q_ref, k_ref, v_ref, mask_ref,
                            wq_ref, bq_ref, wk_ref, bk_ref, wv_ref, bv_ref,
                            wo_ref, bo_ref,
                            out_ref, aw_ref,
                            out_acc, aw_acc,
                            *, n_heads, d_k, d_v, compute_dtype):
    cdt = compute_dtype
    f32 = jnp.float32

    # Current (batch, L-tile) slabs. MXU inputs are fed in compute_dtype
    # (bf16 by default) with f32 accumulation; softmax stays f32.
    Q = q_ref[0].astype(cdt)                  # (tL, d_model)
    K = k_ref[0].astype(cdt)                  # (S,  d_model)
    V = v_ref[0].astype(cdt)                  # (S,  d_model)
    mask = mask_ref[...].astype(f32)          # (tL, S) additive bias

    # Fused QKV projections (Linear with bias); weights already compute_dtype.
    q_s = jnp.dot(Q, wq_ref[...], preferred_element_type=f32) + bq_ref[...]
    k_s = jnp.dot(K, wk_ref[...], preferred_element_type=f32) + bk_ref[...]
    v_s = jnp.dot(V, wv_ref[...], preferred_element_type=f32) + bv_ref[...]

    # Fold 1/sqrt(d_k) into q once instead of scaling every (tL, S) score slab.
    q_s = q_s * f32(1.0 / math.sqrt(d_k))

    # VMEM scratch accumulators (kept out of vregs across the unrolled loop).
    out_acc[...] = jnp.zeros_like(out_acc)
    aw_acc[...] = jnp.zeros_like(aw_acc)

    # n_heads is small & static -> unrolled loop; the output projection is
    # fused per head, so no concat of (L, n_heads*d_v) is ever built.
    # NOTE: per-head contraction depth is d_k (<128 at toy sizes) — inherent
    # to per-head softmax; at production d_k (64/128) the MXU is well fed.
    for h in range(n_heads):
        qh = q_s[:, h * d_k:(h + 1) * d_k].astype(cdt)   # (tL, d_k)
        kh = k_s[:, h * d_k:(h + 1) * d_k].astype(cdt)   # (S,  d_k)
        vh = v_s[:, h * d_v:(h + 1) * d_v].astype(cdt)   # (S,  d_v)

        # q @ k^T without materializing a transpose.
        scores = lax.dot_general(
            qh, kh, dimension_numbers=(((1,), (1,)), ((), ())),
            preferred_element_type=f32) + mask           # (tL, S) f32

        m = jnp.max(scores, axis=-1, keepdims=True)
        p = jnp.exp(scores - m)
        inv = pl.reciprocal(jnp.sum(p, axis=-1, keepdims=True), approx=True)
        attn = p * inv                                   # softmax, f32

        aw_acc[...] += attn

        ho = jnp.dot(attn.astype(cdt), vh, preferred_element_type=f32)  # (tL, d_v)
        # Fused output projection: wo_ref is (H, d_v, d_model).
        out_acc[...] += jnp.dot(ho.astype(cdt), wo_ref[h],
                                preferred_element_type=f32)

    out_ref[0] = (out_acc[...] + bo_ref[...]).astype(out_ref.dtype)
    aw_ref[0] = (aw_acc[...] * f32(1.0 / n_heads)).astype(aw_ref.dtype)


def _choose_l_tile(L, max_tile):
    """Largest tile <= max_tile that divides L and is a multiple of 8
    (or the full L if no such tile exists / L is already small)."""
    if L <= max_tile:
        return L
    start = (max_tile // 8) * 8
    for t in range(start, 7, -8):
        if L % t == 0:
            return t
    return L


def attention_layer(Q, K, V, attn_mask, params, *, n_heads, d_k, d_v,
                    compute_dtype=jnp.bfloat16, max_l_tile=512):
    bs, L, d_model = Q.shape
    S = K.shape[1]

    wq, bq, wk, bk, wv, bv, wo, bo = params
    # Weights in compute_dtype (bf16): feeds the MXU fast path and halves
    # their (double-buffered) VMEM footprint. Biases stay f32.
    wq = wq.astype(compute_dtype)
    wk = wk.astype(compute_dtype)
    wv = wv.astype(compute_dtype)
    # Output projection stored head-major (H, d_v, d_model) so the kernel can
    # fuse it into the head loop with clean leading-index reads (no concat).
    wo_r = wo.reshape(n_heads, d_v, d_model).astype(compute_dtype)
    bq = bq.reshape(1, -1).astype(jnp.float32)
    bk = bk.reshape(1, -1).astype(jnp.float32)
    bv = bv.reshape(1, -1).astype(jnp.float32)
    bo = bo.reshape(1, -1).astype(jnp.float32)
    attn_mask = attn_mask.astype(jnp.float32)

    tL = _choose_l_tile(L, max_l_tile)
    n_lt = L // tL

    kernel = functools.partial(_attention_layer_kernel,
                               n_heads=n_heads, d_k=d_k, d_v=d_v,
                               compute_dtype=compute_dtype)

    # Grid-invariant blocks (weights / biases): constant index_map, so the
    # pipeline never re-copies them across grid steps.
    def const(shape):
        return pl.BlockSpec(shape, lambda b, l: tuple(0 for _ in shape))

    out, attn_mean = pl.pallas_call(
        kernel,
        out_shape=(
            jax.ShapeDtypeStruct((bs, L, d_model), Q.dtype),
            jax.ShapeDtypeStruct((bs, L, S), jnp.float32),
        ),
        grid_spec=pltpu.PrefetchScalarGridSpec(
            num_scalar_prefetch=0,
            grid=(bs, n_lt),
            in_specs=[
                pl.BlockSpec((1, tL, d_model), lambda b, l: (b, l, 0)),  # Q
                pl.BlockSpec((1, S, d_model), lambda b, l: (b, 0, 0)),   # K
                pl.BlockSpec((1, S, d_model), lambda b, l: (b, 0, 0)),   # V
                pl.BlockSpec((tL, S), lambda b, l: (l, 0)),              # mask
                const(wq.shape), const(bq.shape),
                const(wk.shape), const(bk.shape),
                const(wv.shape), const(bv.shape),
                const(wo_r.shape), const(bo.shape),
            ],
            out_specs=[
                pl.BlockSpec((1, tL, d_model), lambda b, l: (b, l, 0)),
                pl.BlockSpec((1, tL, S), lambda b, l: (b, l, 0)),
            ],
            scratch_shapes=[
                pltpu.VMEM((tL, d_model), jnp.float32),  # fused-proj accumulator
                pltpu.VMEM((tL, S), jnp.float32),        # attn-mean accumulator
            ],
        ),
        compiler_params=pltpu.CompilerParams(
            dimension_semantics=("parallel", "parallel"),
            vmem_limit_bytes=64 * 1024 * 1024),
    )(Q, K, V, attn_mask, wq, bq, wk, bk, wv, bv, wo_r, bo)
    return out, attn_mean


def _reference(Q, K, V, attn_mask, params, *, n_heads, d_k, d_v):
    """Plain-JAX f32 reference mirroring the PyTorch forward."""
    wq, bq, wk, bk, wv, bv, wo, bo = params
    bs, L, _ = Q.shape
    S = K.shape[1]
    q = (Q @ wq + bq).reshape(bs, L, n_heads, d_k).transpose(0, 2, 1, 3)
    k = (K @ wk + bk).reshape(bs, S, n_heads, d_k).transpose(0, 2, 3, 1)
    v = (V @ wv + bv).reshape(bs, S, n_heads, d_v).transpose(0, 2, 1, 3)
    scores = jnp.einsum('bhld,bhds->bhls', q, k) / math.sqrt(d_k) + attn_mask
    attn = jax.nn.softmax(scores, axis=-1)
    out = jnp.einsum('bhls,bhsd->bhld', attn, v)
    out = out.transpose(0, 2, 1, 3).reshape(bs, L, n_heads * d_v)
    out = out @ wo + bo
    return out, attn.mean(axis=1)


def _make_inputs(key, bs, L, S, d_model, n_heads, d_k, d_v):
    keys = jax.random.split(key, 12)
    Q = jax.random.normal(keys[0], (bs, L, d_model), jnp.float32)
    K = jax.random.normal(keys[1], (bs, S, d_model), jnp.float32)
    V = jax.random.normal(keys[2], (bs, S, d_model), jnp.float32)
    attn_mask = jnp.zeros((L, S), jnp.float32)
    s = 0.1
    params = (
        s * jax.random.normal(keys[3], (d_model, n_heads * d_k), jnp.float32),
        s * jax.random.normal(keys[4], (n_heads * d_k,), jnp.float32),
        s * jax.random.normal(keys[5], (d_model, n_heads * d_k), jnp.float32),
        s * jax.random.normal(keys[6], (n_heads * d_k,), jnp.float32),
        s * jax.random.normal(keys[7], (d_model, n_heads * d_v), jnp.float32),
        s * jax.random.normal(keys[8], (n_heads * d_v,), jnp.float32),
        s * jax.random.normal(keys[9], (n_heads * d_v, d_model), jnp.float32),
        s * jax.random.normal(keys[10], (d_model,), jnp.float32),
    )
    return Q, K, V, attn_mask, params


if __name__ == "__main__":
    key = jax.random.PRNGKey(0)

    # --- Config 1: small shapes from the module, default bf16 compute path ---
    bs, L, S, d_model, n_heads = 2, 8, 8, 32, 4
    d_k = d_v = d_model // n_heads
    Q, K, V, attn_mask, params = _make_inputs(key, bs, L, S, d_model,
                                              n_heads, d_k, d_v)
    out, attn_mean = attention_layer(Q, K, V, attn_mask, params,
                                     n_heads=n_heads, d_k=d_k, d_v=d_v)
    jax.block_until_ready((out, attn_mean))
    ref_out, ref_attn = _reference(Q, K, V, attn_mask, params,
                                   n_heads=n_heads, d_k=d_k, d_v=d_v)
    # bf16 MXU inputs + approx reciprocal => bf16-level tolerances.
    np.testing.assert_allclose(np.asarray(out), np.asarray(ref_out),
                               rtol=2e-2, atol=2e-2)
    np.testing.assert_allclose(np.asarray(attn_mean), np.asarray(ref_attn),
                               rtol=2e-2, atol=2e-2)

    # --- Config 2: exercise the L-tiled grid (tL=64 -> 2 L tiles), f32 path ---
    key2 = jax.random.PRNGKey(1)
    bs2, L2, S2, d_model2, n_heads2 = 2, 128, 128, 128, 8
    d_k2 = d_v2 = d_model2 // n_heads2
    Q2, K2, V2, mask2, params2 = _make_inputs(key2, bs2, L2, S2, d_model2,
                                              n_heads2, d_k2, d_v2)
    out2, attn_mean2 = attention_layer(Q2, K2, V2, mask2, params2,
                                       n_heads=n_heads2, d_k=d_k2, d_v=d_v2,
                                       compute_dtype=jnp.float32,
                                       max_l_tile=64)
    jax.block_until_ready((out2, attn_mean2))
    ref_out2, ref_attn2 = _reference(Q2, K2, V2, mask2, params2,
                                     n_heads=n_heads2, d_k=d_k2, d_v=d_v2)
    np.testing.assert_allclose(np.asarray(out2), np.asarray(ref_out2),
                               rtol=1e-2, atol=1e-2)
    np.testing.assert_allclose(np.asarray(attn_mean2), np.asarray(ref_attn2),
                               rtol=1e-2, atol=1e-2)

    print("KERNEL_OK")
</pallas_src>

<mosaic_0001>
module attributes {stable_mosaic.version = 11 : i64} {
  func.func @_attention_layer_kernel(%arg0: i32, %arg1: i32, %arg2: memref<1x8x32xf32, #tpu.memory_space<vmem>>, %arg3: memref<1x8x32xf32, #tpu.memory_space<vmem>>, %arg4: memref<1x8x32xf32, #tpu.memory_space<vmem>>, %arg5: memref<8x8xf32, #tpu.memory_space<vmem>>, %arg6: memref<32x32xbf16, #tpu.memory_space<vmem>>, %arg7: memref<1x32xf32, #tpu.memory_space<vmem>>, %arg8: memref<32x32xbf16, #tpu.memory_space<vmem>>, %arg9: memref<1x32xf32, #tpu.memory_space<vmem>>, %arg10: memref<32x32xbf16, #tpu.memory_space<vmem>>, %arg11: memref<1x32xf32, #tpu.memory_space<vmem>>, %arg12: memref<4x8x32xbf16, #tpu.memory_space<vmem>>, %arg13: memref<1x32xf32, #tpu.memory_space<vmem>>, %arg14: memref<1x8x32xf32, #tpu.memory_space<vmem>>, %arg15: memref<1x8x8xf32, #tpu.memory_space<vmem>>, %arg16: memref<8x32xf32, #tpu.memory_space<vmem>>, %arg17: memref<8x8xf32, #tpu.memory_space<vmem>>) attributes {dimension_semantics = [#tpu.dimension_semantics<parallel>, #tpu.dimension_semantics<parallel>], iteration_bounds = array<i64: 2, 1>, scalar_prefetch = 0 : i64, scratch_operands = 2 : i64, tpu.core_type = #tpu.core_type<tc>, window_params = [{transform_indices = @transform_0, window_bounds = array<i64: 1, 8, 32>}, {transform_indices = @transform_1, window_bounds = array<i64: 1, 8, 32>}, {transform_indices = @transform_2, window_bounds = array<i64: 1, 8, 32>}, {transform_indices = @transform_3, window_bounds = array<i64: 8, 8>}, {pipeline_mode = #tpu.pipeline_mode<synchronous>, transform_indices = @transform_4, window_bounds = array<i64: 32, 32>}, {pipeline_mode = #tpu.pipeline_mode<synchronous>, transform_indices = @transform_5, window_bounds = array<i64: 1, 32>}, {pipeline_mode = #tpu.pipeline_mode<synchronous>, transform_indices = @transform_6, window_bounds = array<i64: 32, 32>}, {pipeline_mode = #tpu.pipeline_mode<synchronous>, transform_indices = @transform_7, window_bounds = array<i64: 1, 32>}, {pipeline_mode = #tpu.pipeline_mode<synchronous>, transform_indices = @transform_8, window_bounds = array<i64: 32, 32>}, {pipeline_mode = #tpu.pipeline_mode<synchronous>, transform_indices = @transform_9, window_bounds = array<i64: 1, 32>}, {pipeline_mode = #tpu.pipeline_mode<synchronous>, transform_indices = @transform_10, window_bounds = array<i64: 4, 8, 32>}, {pipeline_mode = #tpu.pipeline_mode<synchronous>, transform_indices = @transform_11, window_bounds = array<i64: 1, 32>}, {transform_indices = @transform_12, window_bounds = array<i64: 1, 8, 32>}, {transform_indices = @transform_13, window_bounds = array<i64: 1, 8, 8>}]} {
    %c0 = arith.constant 0 : index
    %c0_0 = arith.constant 0 : index
    %c0_1 = arith.constant 0 : index
    %0 = vector.load %arg2[%c0, %c0_0, %c0_1] : memref<1x8x32xf32, #tpu.memory_space<vmem>>, vector<1x8x32xf32>
    %1 = vector.shape_cast %0 : vector<1x8x32xf32> to vector<8x32xf32>
    %2 = arith.truncf %1 : vector<8x32xf32> to vector<8x32xbf16>
    %c0_2 = arith.constant 0 : index
    %c0_3 = arith.constant 0 : index
    %c0_4 = arith.constant 0 : index
    %3 = vector.load %arg3[%c0_2, %c0_3, %c0_4] : memref<1x8x32xf32, #tpu.memory_space<vmem>>, vector<1x8x32xf32>
    %4 = vector.shape_cast %3 : vector<1x8x32xf32> to vector<8x32xf32>
    %5 = arith.truncf %4 : vector<8x32xf32> to vector<8x32xbf16>
    %c0_5 = arith.constant 0 : index
    %c0_6 = arith.constant 0 : index
    %c0_7 = arith.constant 0 : index
    %6 = vector.load %arg4[%c0_5, %c0_6, %c0_7] : memref<1x8x32xf32, #tpu.memory_space<vmem>>, vector<1x8x32xf32>
    %7 = vector.shape_cast %6 : vector<1x8x32xf32> to vector<8x32xf32>
    %8 = arith.truncf %7 : vector<8x32xf32> to vector<8x32xbf16>
    %c0_8 = arith.constant 0 : index
    %c0_9 = arith.constant 0 : index
    %9 = vector.load %arg5[%c0_8, %c0_9] : memref<8x8xf32, #tpu.memory_space<vmem>>, vector<8x8xf32>
    %c0_10 = arith.constant 0 : index
    %c0_11 = arith.constant 0 : index
    %10 = vector.load %arg6[%c0_10, %c0_11] : memref<32x32xbf16, #tpu.memory_space<vmem>>, vector<32x32xbf16>
    %cst = arith.constant dense<0.000000e+00> : vector<8x32xf32>
    %11 = tpu.matmul %2, %10, %cst {dimension_numbers = #tpu.dot_dimension_numbers<[1], [0], [0], [1], [0, 0, 1, 1], [], []>} : vector<8x32xbf16>, vector<32x32xbf16>, vector<8x32xf32> -> vector<8x32xf32>
    %c0_12 = arith.constant 0 : index
    %c0_13 = arith.constant 0 : index
    %12 = vector.load %arg7[%c0_12, %c0_13] : memref<1x32xf32, #tpu.memory_space<vmem>>, vector<1x32xf32>
    %13 = vector.broadcast %12 : vector<1x32xf32> to vector<8x32xf32>
    %14 = arith.addf %11, %13 : vector<8x32xf32>
    %c0_14 = arith.constant 0 : index
    %c0_15 = arith.constant 0 : index
    %15 = vector.load %arg8[%c0_14, %c0_15] : memref<32x32xbf16, #tpu.memory_space<vmem>>, vector<32x32xbf16>
    %cst_16 = arith.constant dense<0.000000e+00> : vector<8x32xf32>
    %16 = tpu.matmul %5, %15, %cst_16 {dimension_numbers = #tpu.dot_dimension_numbers<[1], [0], [0], [1], [0, 0, 1, 1], [], []>} : vector<8x32xbf16>, vector<32x32xbf16>, vector<8x32xf32> -> vector<8x32xf32>
    %c0_17 = arith.constant 0 : index
    %c0_18 = arith.constant 0 : index
    %17 = vector.load %arg9[%c0_17, %c0_18] : memref<1x32xf32, #tpu.memory_space<vmem>>, vector<1x32xf32>
    %18 = vector.broadcast %17 : vector<1x32xf32> to vector<8x32xf32>
    %19 = arith.addf %16, %18 : vector<8x32xf32>
    %c0_19 = arith.constant 0 : index
    %c0_20 = arith.constant 0 : index
    %20 = vector.load %arg10[%c0_19, %c0_20] : memref<32x32xbf16, #tpu.memory_space<vmem>>, vector<32x32xbf16>
    %cst_21 = arith.constant dense<0.000000e+00> : vector<8x32xf32>
    %21 = tpu.matmul %8, %20, %cst_21 {dimension_numbers = #tpu.dot_dimension_numbers<[1], [0], [0], [1], [0, 0, 1, 1], [], []>} : vector<8x32xbf16>, vector<32x32xbf16>, vector<8x32xf32> -> vector<8x32xf32>
    %c0_22 = arith.constant 0 : index
    %c0_23 = arith.constant 0 : index
    %22 = vector.load %arg11[%c0_22, %c0_23] : memref<1x32xf32, #tpu.memory_space<vmem>>, vector<1x32xf32>
    %23 = vector.broadcast %22 : vector<1x32xf32> to vector<8x32xf32>
    %24 = arith.addf %21, %23 : vector<8x32xf32>
    %cst_24 = arith.constant 0.353553385 : f32
    %25 = vector.broadcast %cst_24 : f32 to vector<8x32xf32>
    %26 = arith.mulf %14, %25 : vector<8x32xf32>
    %cst_25 = arith.constant 0.000000e+00 : f32
    %27 = vector.broadcast %cst_25 : f32 to vector<8x32xf32>
    %c0_26 = arith.constant 0 : index
    %c0_27 = arith.constant 0 : index
    %28 = vector.load %arg16[%c0_26, %c0_27] : memref<8x32xf32, #tpu.memory_space<vmem>>, vector<8x32xf32>
    tpu.vector_store %arg16[%c0_26, %c0_27], %27 {strides = array<i32>} : memref<8x32xf32, #tpu.memory_space<vmem>>, vector<8x32xf32>,
    %cst_28 = arith.constant 0.000000e+00 : f32
    %29 = vector.broadcast %cst_28 : f32 to vector<8x8xf32>
    %c0_29 = arith.constant 0 : index
    %c0_30 = arith.constant 0 : index
    %30 = vector.load %arg17[%c0_29, %c0_30] : memref<8x8xf32, #tpu.memory_space<vmem>>, vector<8x8xf32>
    tpu.vector_store %arg17[%c0_29, %c0_30], %29 {strides = array<i32>} : memref<8x8xf32, #tpu.memory_space<vmem>>, vector<8x8xf32>,
    %31 = vector.extract_strided_slice %26 {offsets = [0, 0], sizes = [8, 8], strides = [1, 1]} : vector<8x32xf32> to vector<8x8xf32>
    %32 = arith.truncf %31 : vector<8x8xf32> to vector<8x8xbf16>
    %33 = vector.extract_strided_slice %19 {offsets = [0, 0], sizes = [8, 8], strides = [1, 1]} : vector<8x32xf32> to vector<8x8xf32>
    %34 = arith.truncf %33 : vector<8x8xf32> to vector<8x8xbf16>
    %35 = vector.extract_strided_slice %24 {offsets = [0, 0], sizes = [8, 8], strides = [1, 1]} : vector<8x32xf32> to vector<8x8xf32>
    %36 = arith.truncf %35 : vector<8x8xf32> to vector<8x8xbf16>
    %cst_31 = arith.constant dense<0.000000e+00> : vector<8x8xf32>
    %37 = tpu.matmul %32, %34, %cst_31 {dimension_numbers = #tpu.dot_dimension_numbers<[1], [1], [0], [0], [0, 0, 1, 0], [], []>} : vector<8x8xbf16>, vector<8x8xbf16>, vector<8x8xf32> -> vector<8x8xf32>
    %38 = arith.addf %37, %9 : vector<8x8xf32>
    %cst_32 = arith.constant dense<0xFF800000> : vector<8xf32>
    %39 = vector.multi_reduction <maximumf>, %38, %cst_32 [1] : vector<8x8xf32> to vector<8xf32>
    %40 = vector.shape_cast %39 : vector<8xf32> to vector<8x1xf32>
    %41 = vector.broadcast %40 : vector<8x1xf32> to vector<8x8xf32>
    %42 = arith.subf %38, %41 : vector<8x8xf32>
    %43 = math.exp %42 : vector<8x8xf32>
    %cst_33 = arith.constant dense<0.000000e+00> : vector<8xf32>
    %44 = vector.multi_reduction <add>, %43, %cst_33 [1] : vector<8x8xf32> to vector<8xf32>
    %45 = vector.shape_cast %44 : vector<8xf32> to vector<8x1xf32>
    %46 = tpu.reciprocal %45 {approx = true} : vector<8x1xf32> -> vector<8x1xf32>
    %47 = vector.broadcast %46 : vector<8x1xf32> to vector<8x8xf32>
    %48 = arith.mulf %43, %47 : vector<8x8xf32>
    %c0_34 = arith.constant 0 : index
    %c0_35 = arith.constant 0 : index
    %49 = vector.load %arg17[%c0_34, %c0_35] : memref<8x8xf32, #tpu.memory_space<vmem>>, vector<8x8xf32>
    %50 = arith.addf %49, %48 : vector<8x8xf32>
    %c0_36 = arith.constant 0 : index
    %c0_37 = arith.constant 0 : index
    %51 = vector.load %arg17[%c0_36, %c0_37] : memref<8x8xf32, #tpu.memory_space<vmem>>, vector<8x8xf32>
    tpu.vector_store %arg17[%c0_36, %c0_37], %50 {strides = array<i32>} : memref<8x8xf32, #tpu.memory_space<vmem>>, vector<8x8xf32>,
    %52 = arith.truncf %48 : vector<8x8xf32> to vector<8x8xbf16>
    %cst_38 = arith.constant dense<0.000000e+00> : vector<8x8xf32>
    %53 = tpu.matmul %52, %36, %cst_38 {dimension_numbers = #tpu.dot_dimension_numbers<[1], [0], [0], [1], [0, 0, 1, 1], [], []>} : vector<8x8xbf16>, vector<8x8xbf16>, vector<8x8xf32> -> vector<8x8xf32>
    %c0_39 = arith.constant 0 : index
    %c0_40 = arith.constant 0 : index
    %54 = vector.load %arg16[%c0_39, %c0_40] : memref<8x32xf32, #tpu.memory_space<vmem>>, vector<8x32xf32>
    %55 = arith.truncf %53 : vector<8x8xf32> to vector<8x8xbf16>
    %c0_41 = arith.constant 0 : index
    %c0_42 = arith.constant 0 : index
    %c0_43 = arith.constant 0 : index
    %56 = vector.load %arg12[%c0_41, %c0_42, %c0_43] : memref<4x8x32xbf16, #tpu.memory_space<vmem>>, vector<1x8x32xbf16>
    %57 = vector.shape_cast %56 : vector<1x8x32xbf16> to vector<8x32xbf16>
    %cst_44 = arith.constant dense<0.000000e+00> : vector<8x32xf32>
    %58 = tpu.matmul %55, %57, %cst_44 {dimension_numbers = #tpu.dot_dimension_numbers<[1], [0], [0], [1], [0, 0, 1, 1], [], []>} : vector<8x8xbf16>, vector<8x32xbf16>, vector<8x32xf32> -> vector<8x32xf32>
    %59 = arith.addf %54, %58 : vector<8x32xf32>
    %c0_45 = arith.constant 0 : index
    %c0_46 = arith.constant 0 : index
    %60 = vector.load %arg16[%c0_45, %c0_46] : memref<8x32xf32, #tpu.memory_space<vmem>>, vector<8x32xf32>
    tpu.vector_store %arg16[%c0_45, %c0_46], %59 {strides = array<i32>} : memref<8x32xf32, #tpu.memory_space<vmem>>, vector<8x32xf32>,
    %61 = vector.extract_strided_slice %26 {offsets = [0, 8], sizes = [8, 8], strides = [1, 1]} : vector<8x32xf32> to vector<8x8xf32>
    %62 = arith.truncf %61 : vector<8x8xf32> to vector<8x8xbf16>
    %63 = vector.extract_strided_slice %19 {offsets = [0, 8], sizes = [8, 8], strides = [1, 1]} : vector<8x32xf32> to vector<8x8xf32>
    %64 = arith.truncf %63 : vector<8x8xf32> to vector<8x8xbf16>
    %65 = vector.extract_strided_slice %24 {offsets = [0, 8], sizes = [8, 8], strides = [1, 1]} : vector<8x32xf32> to vector<8x8xf32>
    %66 = arith.truncf %65 : vector<8x8xf32> to vector<8x8xbf16>
    %cst_47 = arith.constant dense<0.000000e+00> : vector<8x8xf32>
    %67 = tpu.matmul %62, %64, %cst_47 {dimension_numbers = #tpu.dot_dimension_numbers<[1], [1], [0], [0], [0, 0, 1, 0], [], []>} : vector<8x8xbf16>, vector<8x8xbf16>, vector<8x8xf32> -> vector<8x8xf32>
    %68 = arith.addf %67, %9 : vector<8x8xf32>
    %cst_48 = arith.constant dense<0xFF800000> : vector<8xf32>
    %69 = vector.multi_reduction <maximumf>, %68, %cst_48 [1] : vector<8x8xf32> to vector<8xf32>
    %70 = vector.shape_cast %69 : vector<8xf32> to vector<8x1xf32>
    %71 = vector.broadcast %70 : vector<8x1xf32> to vector<8x8xf32>
    %72 = arith.subf %68, %71 : vector<8x8xf32>
    %73 = math.exp %72 : vector<8x8xf32>
    %cst_49 = arith.constant dense<0.000000e+00> : vector<8xf32>
    %74 = vector.multi_reduction <add>, %73, %cst_49 [1] : vector<8x8xf32> to vector<8xf32>
    %75 = vector.shape_cast %74 : vector<8xf32> to vector<8x1xf32>
    %76 = tpu.reciprocal %75 {approx = true} : vector<8x1xf32> -> vector<8x1xf32>
    %77 = vector.broadcast %76 : vector<8x1xf32> to vector<8x8xf32>
    %78 = arith.mulf %73, %77 : vector<8x8xf32>
    %c0_50 = arith.constant 0 : index
    %c0_51 = arith.constant 0 : index
    %79 = vector.load %arg17[%c0_50, %c0_51] : memref<8x8xf32, #tpu.memory_space<vmem>>, vector<8x8xf32>
    %80 = arith.addf %79, %78 : vector<8x8xf32>
    %c0_52 = arith.constant 0 : index
    %c0_53 = arith.constant 0 : index
    %81 = vector.load %arg17[%c0_52, %c0_53] : memref<8x8xf32, #tpu.memory_space<vmem>>, vector<8x8xf32>
    tpu.vector_store %arg17[%c0_52, %c0_53], %80 {strides = array<i32>} : memref<8x8xf32, #tpu.memory_space<vmem>>, vector<8x8xf32>,
    %82 = arith.truncf %78 : vector<8x8xf32> to vector<8x8xbf16>
    %cst_54 = arith.constant dense<0.000000e+00> : vector<8x8xf32>
    %83 = tpu.matmul %82, %66, %cst_54 {dimension_numbers = #tpu.dot_dimension_numbers<[1], [0], [0], [1], [0, 0, 1, 1], [], []>} : vector<8x8xbf16>, vector<8x8xbf16>, vector<8x8xf32> -> vector<8x8xf32>
    %c0_55 = arith.constant 0 : index
    %c0_56 = arith.constant 0 : index
    %84 = vector.load %arg16[%c0_55, %c0_56] : memref<8x32xf32, #tpu.memory_space<vmem>>, vector<8x32xf32>
    %85 = arith.truncf %83 : vector<8x8xf32> to vector<8x8xbf16>
    %c1 = arith.constant 1 : index
    %c0_57 = arith.constant 0 : index
    %c0_58 = arith.constant 0 : index
    %86 = vector.load %arg12[%c1, %c0_57, %c0_58] : memref<4x8x32xbf16, #tpu.memory_space<vmem>>, vector<1x8x32xbf16>
    %87 = vector.shape_cast %86 : vector<1x8x32xbf16> to vector<8x32xbf16>
    %cst_59 = arith.constant dense<0.000000e+00> : vector<8x32xf32>
    %88 = tpu.matmul %85, %87, %cst_59 {dimension_numbers = #tpu.dot_dimension_numbers<[1], [0], [0], [1], [0, 0, 1, 1], [], []>} : vector<8x8xbf16>, vector<8x32xbf16>, vector<8x32xf32> -> vector<8x32xf32>
    %89 = arith.addf %84, %88 : vector<8x32xf32>
    %c0_60 = arith.constant 0 : index
    %c0_61 = arith.constant 0 : index
    %90 = vector.load %arg16[%c0_60, %c0_61] : memref<8x32xf32, #tpu.memory_space<vmem>>, vector<8x32xf32>
    tpu.vector_store %arg16[%c0_60, %c0_61], %89 {strides = array<i32>} : memref<8x32xf32, #tpu.memory_space<vmem>>, vector<8x32xf32>,
    %91 = vector.extract_strided_slice %26 {offsets = [0, 16], sizes = [8, 8], strides = [1, 1]} : vector<8x32xf32> to vector<8x8xf32>
    %92 = arith.truncf %91 : vector<8x8xf32> to vector<8x8xbf16>
    %93 = vector.extract_strided_slice %19 {offsets = [0, 16], sizes = [8, 8], strides = [1, 1]} : vector<8x32xf32> to vector<8x8xf32>
    %94 = arith.truncf %93 : vector<8x8xf32> to vector<8x8xbf16>
    %95 = vector.extract_strided_slice %24 {offsets = [0, 16], sizes = [8, 8], strides = [1, 1]} : vector<8x32xf32> to vector<8x8xf32>
    %96 = arith.truncf %95 : vector<8x8xf32> to vector<8x8xbf16>
    %cst_62 = arith.constant dense<0.000000e+00> : vector<8x8xf32>
    %97 = tpu.matmul %92, %94, %cst_62 {dimension_numbers = #tpu.dot_dimension_numbers<[1], [1], [0], [0], [0, 0, 1, 0], [], []>} : vector<8x8xbf16>, vector<8x8xbf16>, vector<8x8xf32> -> vector<8x8xf32>
    %98 = arith.addf %97, %9 : vector<8x8xf32>
    %cst_63 = arith.constant dense<0xFF800000> : vector<8xf32>
    %99 = vector.multi_reduction <maximumf>, %98, %cst_63 [1] : vector<8x8xf32> to vector<8xf32>
    %100 = vector.shape_cast %99 : vector<8xf32> to vector<8x1xf32>
    %101 = vector.broadcast %100 : vector<8x1xf32> to vector<8x8xf32>
    %102 = arith.subf %98, %101 : vector<8x8xf32>
    %103 = math.exp %102 : vector<8x8xf32>
    %cst_64 = arith.constant dense<0.000000e+00> : vector<8xf32>
    %104 = vector.multi_reduction <add>, %103, %cst_64 [1] : vector<8x8xf32> to vector<8xf32>
    %105 = vector.shape_cast %104 : vector<8xf32> to vector<8x1xf32>
    %106 = tpu.reciprocal %105 {approx = true} : vector<8x1xf32> -> vector<8x1xf32>
    %107 = vector.broadcast %106 : vector<8x1xf32> to vector<8x8xf32>
    %108 = arith.mulf %103, %107 : vector<8x8xf32>
    %c0_65 = arith.constant 0 : index
    %c0_66 = arith.constant 0 : index
    %109 = vector.load %arg17[%c0_65, %c0_66] : memref<8x8xf32, #tpu.memory_space<vmem>>, vector<8x8xf32>
    %110 = arith.addf %109, %108 : vector<8x8xf32>
    %c0_67 = arith.constant 0 : index
    %c0_68 = arith.constant 0 : index
    %111 = vector.load %arg17[%c0_67, %c0_68] : memref<8x8xf32, #tpu.memory_space<vmem>>, vector<8x8xf32>
    tpu.vector_store %arg17[%c0_67, %c0_68], %110 {strides = array<i32>} : memref<8x8xf32, #tpu.memory_space<vmem>>, vector<8x8xf32>,
    %112 = arith.truncf %108 : vector<8x8xf32> to vector<8x8xbf16>
    %cst_69 = arith.constant dense<0.000000e+00> : vector<8x8xf32>
    %113 = tpu.matmul %112, %96, %cst_69 {dimension_numbers = #tpu.dot_dimension_numbers<[1], [0], [0], [1], [0, 0, 1, 1], [], []>} : vector<8x8xbf16>, vector<8x8xbf16>, vector<8x8xf32> -> vector<8x8xf32>
    %c0_70 = arith.constant 0 : index
    %c0_71 = arith.constant 0 : index
    %114 = vector.load %arg16[%c0_70, %c0_71] : memref<8x32xf32, #tpu.memory_space<vmem>>, vector<8x32xf32>
    %115 = arith.truncf %113 : vector<8x8xf32> to vector<8x8xbf16>
    %c2 = arith.constant 2 : index
    %c0_72 = arith.constant 0 : index
    %c0_73 = arith.constant 0 : index
    %116 = vector.load %arg12[%c2, %c0_72, %c0_73] : memref<4x8x32xbf16, #tpu.memory_space<vmem>>, vector<1x8x32xbf16>
    %117 = vector.shape_cast %116 : vector<1x8x32xbf16> to vector<8x32xbf16>
    %cst_74 = arith.constant dense<0.000000e+00> : vector<8x32xf32>
    %118 = tpu.matmul %115, %117, %cst_74 {dimension_numbers = #tpu.dot_dimension_numbers<[1], [0], [0], [1], [0, 0, 1, 1], [], []>} : vector<8x8xbf16>, vector<8x32xbf16>, vector<8x32xf32> -> vector<8x32xf32>
    %119 = arith.addf %114, %118 : vector<8x32xf32>
    %c0_75 = arith.constant 0 : index
    %c0_76 = arith.constant 0 : index
    %120 = vector.load %arg16[%c0_75, %c0_76] : memref<8x32xf32, #tpu.memory_space<vmem>>, vector<8x32xf32>
    tpu.vector_store %arg16[%c0_75, %c0_76], %119 {strides = array<i32>} : memref<8x32xf32, #tpu.memory_space<vmem>>, vector<8x32xf32>,
    %121 = vector.extract_strided_slice %26 {offsets = [0, 24], sizes = [8, 8], strides = [1, 1]} : vector<8x32xf32> to vector<8x8xf32>
    %122 = arith.truncf %121 : vector<8x8xf32> to vector<8x8xbf16>
    %123 = vector.extract_strided_slice %19 {offsets = [0, 24], sizes = [8, 8], strides = [1, 1]} : vector<8x32xf32> to vector<8x8xf32>
    %124 = arith.truncf %123 : vector<8x8xf32> to vector<8x8xbf16>
    %125 = vector.extract_strided_slice %24 {offsets = [0, 24], sizes = [8, 8], strides = [1, 1]} : vector<8x32xf32> to vector<8x8xf32>
    %126 = arith.truncf %125 : vector<8x8xf32> to vector<8x8xbf16>
    %cst_77 = arith.constant dense<0.000000e+00> : vector<8x8xf32>
    %127 = tpu.matmul %122, %124, %cst_77 {dimension_numbers = #tpu.dot_dimension_numbers<[1], [1], [0], [0], [0, 0, 1, 0], [], []>} : vector<8x8xbf16>, vector<8x8xbf16>, vector<8x8xf32> -> vector<8x8xf32>
    %128 = arith.addf %127, %9 : vector<8x8xf32>
    %cst_78 = arith.constant dense<0xFF800000> : vector<8xf32>
    %129 = vector.multi_reduction <maximumf>, %128, %cst_78 [1] : vector<8x8xf32> to vector<8xf32>
    %130 = vector.shape_cast %129 : vector<8xf32> to vector<8x1xf32>
    %131 = vector.broadcast %130 : vector<8x1xf32> to vector<8x8xf32>
    %132 = arith.subf %128, %131 : vector<8x8xf32>
    %133 = math.exp %132 : vector<8x8xf32>
    %cst_79 = arith.constant dense<0.000000e+00> : vector<8xf32>
    %134 = vector.multi_reduction <add>, %133, %cst_79 [1] : vector<8x8xf32> to vector<8xf32>
    %135 = vector.shape_cast %134 : vector<8xf32> to vector<8x1xf32>
    %136 = tpu.reciprocal %135 {approx = true} : vector<8x1xf32> -> vector<8x1xf32>
    %137 = vector.broadcast %136 : vector<8x1xf32> to vector<8x8xf32>
    %138 = arith.mulf %133, %137 : vector<8x8xf32>
    %c0_80 = arith.constant 0 : index
    %c0_81 = arith.constant 0 : index
    %139 = vector.load %arg17[%c0_80, %c0_81] : memref<8x8xf32, #tpu.memory_space<vmem>>, vector<8x8xf32>
    %140 = arith.addf %139, %138 : vector<8x8xf32>
    %c0_82 = arith.constant 0 : index
    %c0_83 = arith.constant 0 : index
    %141 = vector.load %arg17[%c0_82, %c0_83] : memref<8x8xf32, #tpu.memory_space<vmem>>, vector<8x8xf32>
    tpu.vector_store %arg17[%c0_82, %c0_83], %140 {strides = array<i32>} : memref<8x8xf32, #tpu.memory_space<vmem>>, vector<8x8xf32>,
    %142 = arith.truncf %138 : vector<8x8xf32> to vector<8x8xbf16>
    %cst_84 = arith.constant dense<0.000000e+00> : vector<8x8xf32>
    %143 = tpu.matmul %142, %126, %cst_84 {dimension_numbers = #tpu.dot_dimension_numbers<[1], [0], [0], [1], [0, 0, 1, 1], [], []>} : vector<8x8xbf16>, vector<8x8xbf16>, vector<8x8xf32> -> vector<8x8xf32>
    %c0_85 = arith.constant 0 : index
    %c0_86 = arith.constant 0 : index
    %144 = vector.load %arg16[%c0_85, %c0_86] : memref<8x32xf32, #tpu.memory_space<vmem>>, vector<8x32xf32>
    %145 = arith.truncf %143 : vector<8x8xf32> to vector<8x8xbf16>
    %c3 = arith.constant 3 : index
    %c0_87 = arith.constant 0 : index
    %c0_88 = arith.constant 0 : index
    %146 = vector.load %arg12[%c3, %c0_87, %c0_88] : memref<4x8x32xbf16, #tpu.memory_space<vmem>>, vector<1x8x32xbf16>
    %147 = vector.shape_cast %146 : vector<1x8x32xbf16> to vector<8x32xbf16>
    %cst_89 = arith.constant dense<0.000000e+00> : vector<8x32xf32>
    %148 = tpu.matmul %145, %147, %cst_89 {dimension_numbers = #tpu.dot_dimension_numbers<[1], [0], [0], [1], [0, 0, 1, 1], [], []>} : vector<8x8xbf16>, vector<8x32xbf16>, vector<8x32xf32> -> vector<8x32xf32>
    %149 = arith.addf %144, %148 : vector<8x32xf32>
    %c0_90 = arith.constant 0 : index
    %c0_91 = arith.constant 0 : index
    %150 = vector.load %arg16[%c0_90, %c0_91] : memref<8x32xf32, #tpu.memory_space<vmem>>, vector<8x32xf32>
    tpu.vector_store %arg16[%c0_90, %c0_91], %149 {strides = array<i32>} : memref<8x32xf32, #tpu.memory_space<vmem>>, vector<8x32xf32>,
    %c0_92 = arith.constant 0 : index
    %c0_93 = arith.constant 0 : index
    %151 = vector.load %arg16[%c0_92, %c0_93] : memref<8x32xf32, #tpu.memory_space<vmem>>, vector<8x32xf32>
    %c0_94 = arith.constant 0 : index
    %c0_95 = arith.constant 0 : index
    %152 = vector.load %arg13[%c0_94, %c0_95] : memref<1x32xf32, #tpu.memory_space<vmem>>, vector<1x32xf32>
    %153 = vector.broadcast %152 : vector<1x32xf32> to vector<8x32xf32>
    %154 = arith.addf %151, %153 : vector<8x32xf32>
    %c0_96 = arith.constant 0 : index
    %c0_97 = arith.constant 0 : index
    %c0_98 = arith.constant 0 : index
    %155 = vector.load %arg14[%c0_96, %c0_97, %c0_98] : memref<1x8x32xf32, #tpu.memory_space<vmem>>, vector<1x8x32xf32>
    %156 = vector.shape_cast %155 : vector<1x8x32xf32> to vector<8x32xf32>
    %157 = vector.shape_cast %154 : vector<8x32xf32> to vector<1x8x32xf32>
    tpu.vector_store %arg14[%c0_96, %c0_97, %c0_98], %157 {strides = array<i32>} : memref<1x8x32xf32, #tpu.memory_space<vmem>>, vector<1x8x32xf32>,
    %c0_99 = arith.constant 0 : index
    %c0_100 = arith.constant 0 : index
    %158 = vector.load %arg17[%c0_99, %c0_100] : memref<8x8xf32, #tpu.memory_space<vmem>>, vector<8x8xf32>
    %cst_101 = arith.constant 2.500000e-01 : f32
    %159 = vector.broadcast %cst_101 : f32 to vector<8x8xf32>
    %160 = arith.mulf %158, %159 : vector<8x8xf32>
    %c0_102 = arith.constant 0 : index
    %c0_103 = arith.constant 0 : index
    %c0_104 = arith.constant 0 : index
    %161 = vector.load %arg15[%c0_102, %c0_103, %c0_104] : memref<1x8x8xf32, #tpu.memory_space<vmem>>, vector<1x8x8xf32>
    %162 = vector.shape_cast %161 : vector<1x8x8xf32> to vector<8x8xf32>
    %163 = vector.shape_cast %160 : vector<8x8xf32> to vector<1x8x8xf32>
    tpu.vector_store %arg15[%c0_102, %c0_103, %c0_104], %163 {strides = array<i32>} : memref<1x8x8xf32, #tpu.memory_space<vmem>>, vector<1x8x8xf32>,
    return
  }
  func.func @transform_0(%arg0: i32, %arg1: i32) -> (i32, i32, i32) {
    %c0_i32 = arith.constant 0 : i32
    %c0_i32_0 = arith.constant 0 : i32
    return %arg0, %arg1, %c0_i32 : i32, i32, i32
  }
  func.func @transform_1(%arg0: i32, %arg1: i32) -> (i32, i32, i32) {
    %c0_i32 = arith.constant 0 : i32
    %c0_i32_0 = arith.constant 0 : i32
    %c0_i32_1 = arith.constant 0 : i32
    return %arg0, %c0_i32, %c0_i32_0 : i32, i32, i32
  }
  func.func @transform_2(%arg0: i32, %arg1: i32) -> (i32, i32, i32) {
    %c0_i32 = arith.constant 0 : i32
    %c0_i32_0 = arith.constant 0 : i32
    %c0_i32_1 = arith.constant 0 : i32
    return %arg0, %c0_i32, %c0_i32_0 : i32, i32, i32
  }
  func.func @transform_3(%arg0: i32, %arg1: i32) -> (i32, i32) {
    %c0_i32 = arith.constant 0 : i32
    %c0_i32_0 = arith.constant 0 : i32
    return %arg1, %c0_i32 : i32, i32
  }
  func.func @transform_4(%arg0: i32, %arg1: i32) -> (i32, i32) {
    %c0_i32 = arith.constant 0 : i32
    %c0_i32_0 = arith.constant 0 : i32
    %c0_i32_1 = arith.constant 0 : i32
    return %c0_i32, %c0_i32_0 : i32, i32
  }
  func.func @transform_5(%arg0: i32, %arg1: i32) -> (i32, i32) {
    %c0_i32 = arith.constant 0 : i32
    %c0_i32_0 = arith.constant 0 : i32
    %c0_i32_1 = arith.constant 0 : i32
    return %c0_i32, %c0_i32_0 : i32, i32
  }
  func.func @transform_6(%arg0: i32, %arg1: i32) -> (i32, i32) {
    %c0_i32 = arith.constant 0 : i32
    %c0_i32_0 = arith.constant 0 : i32
    %c0_i32_1 = arith.constant 0 : i32
    return %c0_i32, %c0_i32_0 : i32, i32
  }
  func.func @transform_7(%arg0: i32, %arg1: i32) -> (i32, i32) {
    %c0_i32 = arith.constant 0 : i32
    %c0_i32_0 = arith.constant 0 : i32
    %c0_i32_1 = arith.constant 0 : i32
    return %c0_i32, %c0_i32_0 : i32, i32
  }
  func.func @transform_8(%arg0: i32, %arg1: i32) -> (i32, i32) {
    %c0_i32 = arith.constant 0 : i32
    %c0_i32_0 = arith.constant 0 : i32
    %c0_i32_1 = arith.constant 0 : i32
    return %c0_i32, %c0_i32_0 : i32, i32
  }
  func.func @transform_9(%arg0: i32, %arg1: i32) -> (i32, i32) {
    %c0_i32 = arith.constant 0 : i32
    %c0_i32_0 = arith.constant 0 : i32
    %c0_i32_1 = arith.constant 0 : i32
    return %c0_i32, %c0_i32_0 : i32, i32
  }
  func.func @transform_10(%arg0: i32, %arg1: i32) -> (i32, i32, i32) {
    %c0_i32 = arith.constant 0 : i32
    %c0_i32_0 = arith.constant 0 : i32
    %c0_i32_1 = arith.constant 0 : i32
    %c0_i32_2 = arith.constant 0 : i32
    return %c0_i32, %c0_i32_0, %c0_i32_1 : i32, i32, i32
  }
  func.func @transform_11(%arg0: i32, %arg1: i32) -> (i32, i32) {
    %c0_i32 = arith.constant 0 : i32
    %c0_i32_0 = arith.constant 0 : i32
    %c0_i32_1 = arith.constant 0 : i32
    return %c0_i32, %c0_i32_0 : i32, i32
  }
  func.func @transform_12(%arg0: i32, %arg1: i32) -> (i32, i32, i32) {
    %c0_i32 = arith.constant 0 : i32
    %c0_i32_0 = arith.constant 0 : i32
    return %arg0, %arg1, %c0_i32 : i32, i32, i32
  }
  func.func @transform_13(%arg0: i32, %arg1: i32) -> (i32, i32, i32) {
    %c0_i32 = arith.constant 0 : i32
    %c0_i32_0 = arith.constant 0 : i32
    return %arg0, %arg1, %c0_i32 : i32, i32, i32
  }
}

</mosaic_0001>

<llo_original>
// kernel: tpu_custom_call.1
$region0: #{tpu_custom_call.1}
  #allocation0 [shape = 'u32[]', space=smem, size = 0x4, offset = 0x4, fixed_abs, tag = 'smem constant byte address 0x4 - core index']
  #allocation1 [shape = 'u32[144,128]{1,0:T(1,128)}', space=vmem, size = 0x12000, scoped, tag = 'internal scratch']
  #allocation2 [shape = 'f32[8,32]{1,0:T(8,128)}', space=vmem, size = 0x1000, scoped, tag = 'scratch operand']
  #allocation3 [shape = 'f32[8,8]{1,0:T(8,128)}', space=vmem, size = 0x1000, scoped, tag = 'scratch operand']
  %s0 = inlined_call_operand.hbm [shape: f32[2,8,32], index: 0, kind: input, shape index: {}]
  %s1 = inlined_call_operand.hbm [shape: f32[2,8,32], index: 1, kind: input, shape index: {}]
  %s2 = inlined_call_operand.hbm [shape: f32[2,8,32], index: 2, kind: input, shape index: {}]
  %s3 = inlined_call_operand.hbm [shape: f32[8,8], index: 3, kind: input, shape index: {}]
  %s4 = inlined_call_operand.hbm [shape: bf16[32,32], index: 4, kind: input, shape index: {}]
  %s5 = inlined_call_operand.hbm [shape: f32[1,32], index: 5, kind: input, shape index: {}]
  %s6 = inlined_call_operand.hbm [shape: bf16[32,32], index: 6, kind: input, shape index: {}]
  %s7 = inlined_call_operand.hbm [shape: f32[1,32], index: 7, kind: input, shape index: {}]
  %s8 = inlined_call_operand.hbm [shape: bf16[32,32], index: 8, kind: input, shape index: {}]
  %s9 = inlined_call_operand.hbm [shape: f32[1,32], index: 9, kind: input, shape index: {}]
  %s10 = inlined_call_operand.hbm [shape: bf16[4,8,32], index: 10, kind: input, shape index: {}]
  %s11 = inlined_call_operand.hbm [shape: f32[1,32], index: 11, kind: input, shape index: {}]
  %s12 = inlined_call_operand.hbm [shape: f32[2,8,32], index: 12, kind: output, shape index: {0}]
  %s13 = inlined_call_operand.hbm [shape: f32[2,8,8], index: 13, kind: output, shape index: {1}]
  %14 = xla_tuple %s12, %s13
  %s15 = sld [smem:[#allocation0]]
  $region137: #{tpu_custom_call.1} parent=0
    _
  %s17 = ssub.s32 1, %s15
  %s18 = scalar_select 0, %s17, %s15
  $region1: #{tpu_custom_call.1} parent=0
    #allocation4 [shape = 'u8[8192]{0}', space=vmem, size = 0x2000, scoped, tag = 'input window, operand 0']
    #allocation5 [shape = 's32[2]{0}', space=sflag, size = 0x8, scoped, tag = 'scoped memory for tpu_custom_call.1']
    #allocation6 [shape = 's32[2]{0}', space=sflag, size = 0x8, scoped, tag = 'scoped memory for tpu_custom_call.1']
    #allocation7 [shape = 'u8[8192]{0}', space=vmem, size = 0x2000, scoped, tag = 'input window, operand 1']
    #allocation8 [shape = 's32[2]{0}', space=sflag, size = 0x8, scoped, tag = 'scoped memory for tpu_custom_call.1']
    #allocation9 [shape = 'u8[8192]{0}', space=vmem, size = 0x2000, scoped, tag = 'input window, operand 2']
    #allocation10 [shape = 'u8[4096]{0}', space=vmem, size = 0x1000, scoped, tag = 'input window, operand 3, single buffered']
    #allocation11 [shape = 's32[1]{0}', space=sflag, size = 0x4, scoped, tag = 'scoped memory for tpu_custom_call.1']
    #allocation12 [shape = 'u8[8192]{0}', space=vmem, size = 0x2000, scoped, tag = 'input window, operand 4, single buffered']
    #allocation13 [shape = 'u8[512]{0}', space=vmem, size = 0x400, scoped, tag = 'input window, operand 5, single buffered']
    #allocation14 [shape = 's32[1]{0}', space=sflag, size = 0x4, scoped, tag = 'scoped memory for tpu_custom_call.1']
    #allocation15 [shape = 'u8[8192]{0}', space=vmem, size = 0x2000, scoped, tag = 'input window, operand 6, single buffered']
    #allocation16 [shape = 'u8[512]{0}', space=vmem, size = 0x400, scoped, tag = 'input window, operand 7, single buffered']
    #allocation17 [shape = 's32[1]{0}', space=sflag, size = 0x4, scoped, tag = 'scoped memory for tpu_custom_call.1']
    #allocation18 [shape = 'u8[8192]{0}', space=vmem, size = 0x2000, scoped, tag = 'input window, operand 8, single buffered']
    #allocation19 [shape = 'u8[512]{0}', space=vmem, size = 0x400, scoped, tag = 'input window, operand 9, single buffered']
    #allocation20 [shape = 's32[1]{0}', space=sflag, size = 0x4, scoped, tag = 'scoped memory for tpu_custom_call.1']
    #allocation21 [shape = 'u8[8192]{0}', space=vmem, size = 0x2000, scoped, tag = 'input window, operand 10, single buffered']
    #allocation22 [shape = 'u8[512]{0}', space=vmem, size = 0x400, scoped, tag = 'input window, operand 11, single buffered']
    #allocation23 [shape = 's32[1]{0}', space=sflag, size = 0x4, scoped, tag = 'scoped memory for tpu_custom_call.1']
    #allocation24 [shape = 'u8[8192]{0}', space=vmem, size = 0x2000, scoped, tag = 'output window, operand 0']
    #allocation25 [shape = 'u8[8192]{0}', space=vmem, size = 0x2000, scoped, tag = 'output window, operand 1']
    #allocation26 [shape = 's32[2]{0}', space=sflag, size = 0x8, scoped, tag = 'scoped memory for tpu_custom_call.1']
    %19 = vsyncpa [#allocation5], 0
    %s20 = scalar_lea.sflag [#allocation5], 1
    %21 = vsyncpa %s20, 0
    %22 = vsyncpa [#allocation8], 0
    %s23 = scalar_lea.sflag [#allocation8], 1
    %24 = vsyncpa %s23, 0
    %25 = vsyncpa [#allocation11], 0
    %26 = vsyncpa [#allocation14], 0
    %27 = vsyncpa [#allocation17], 0
    %28 = vsyncpa [#allocation20], 0
    %29 = vsyncpa [#allocation23], 0
    %30 = vsyncpa [#allocation6], 0
    %s31 = scalar_lea.sflag [#allocation6], 1
    %32 = vsyncpa %s31, 0
    %33 = vsyncpa [#allocation26], 0
    %s34 = scalar_lea.sflag [#allocation26], 1
    %35 = vsyncpa %s34, 0
    loop: start=0, step=1, limit=4
    $region2: #{tpu_custom_call.1} parent=1 // loop_pre_header
      _
    $region3: #{tpu_custom_call.1} parent=1 // loop_header
      %s37 = sphi 0, %s41
      %p38 = scmp.ge.s32.totalorder %s37, 4
      %s44 = sphi 0, %s56
      %s45 = sphi 0, %s52
      %s46 = sphi 0, %s44
      %s47 = sphi 0, %s45
      %s48 = sphi 0, %s46
      %s49 = sphi 0, %s47
      %s61 = sphi 0, %s63
      %s64 = sphi 0, %s61
      %s65 = sphi 0, %s64
      %s81 = sphi 0, %s65
      %s87 = sphi 0, %s89
      %s90 = sphi 0, %s87
      %s91 = sphi 0, %s90
      %s107 = sphi 0, %s91
      %s113 = sphi 0, %s115
      %s116 = sphi 0, %s113
      %s117 = sphi 0, %s116
      %s133 = sphi 0, %s117
      %s139 = sphi 0, %s141
      %s142 = sphi 0, %s139
      %s143 = sphi 0, %s142
      %s159 = sphi 0, %s143
      %s163 = sphi 0, %s163
      %s165 = sphi 0, %s163
      %s166 = sphi 0, %s165
      %s180 = sphi 0, %s166
      %s184 = sphi 0, %s184
      %s186 = sphi 0, %s184
      %s187 = sphi 0, %s186
      %s201 = sphi 0, %s187
      %s205 = sphi 0, %s205
      %s207 = sphi 0, %s205
      %s208 = sphi 0, %s207
      %s222 = sphi 0, %s208
      %s226 = sphi 0, %s226
      %s228 = sphi 0, %s226
      %s229 = sphi 0, %s228
      %s243 = sphi 0, %s229
      %s247 = sphi 0, %s247
      %s249 = sphi 0, %s247
      %s250 = sphi 0, %s249
      %s264 = sphi 0, %s250
      %s268 = sphi 0, %s268
      %s270 = sphi 0, %s268
      %s271 = sphi 0, %s270
      %s285 = sphi 0, %s271
      %s289 = sphi 0, %s289
      %s291 = sphi 0, %s289
      %s292 = sphi 0, %s291
      %s306 = sphi 0, %s292
      %s310 = sphi 0, %s310
      %s312 = sphi 0, %s310
      %s313 = sphi 0, %s312
      %s327 = sphi 0, %s313
      %s335 = sphi 0, %s337
      %s338 = sphi 0, %s335
      %s339 = sphi 0, %s338
      %s355 = sphi 0, %s339
      %s363 = sphi 0, %s365
      %s366 = sphi 0, %s363
      %s367 = sphi 0, %s366
      %s383 = sphi 0, %s367
    $region4: #{tpu_custom_call.1} parent=1 // loop_header_branch
      %40 = sbr.rel (%p38) target = $region8
    $region5: #{tpu_custom_call.1} parent=1 // loop_body
      %s42 = ssub.s32 %s37, 1
      %s43 = ssub.s32 %s37, 2
      %s50 = sadd.s32 1, %s45
      %p51 = scmp.ge.s32.totalorder %s50, 1
      %s52 = scalar_select %p51, 0, %s50
      %s53 = sadd.s32 1, %s44
      %s54 = scalar_select %p51, %s53, %s44
      %p55 = scmp.ge.s32.totalorder %s54, 2
      %s56 = scalar_select %p55, 0, %s54
      %s57 = ssub.s32 %s44, %s56
      %s58 = ssub.s32 %s45, %s52
      %s59 = sor.u32 %s57, %s58
      %p60 = scmp.eq.s32.totalorder %s59, 0
      %s62 = sadd.s32 %s61, 1
      %s63 = scalar_select %p60, %s61, %s62
      %p66 = pneg %p60
      %p67 = scmp.eq.s32.totalorder %s37, 1
      %p68 = por %p66, %p67
      %p69 = scmp.ne.s32.totalorder %s61, %s64
      %p70 = scmp.eq.s32.totalorder %s37, 0
      %p71 = por %p69, %p70
      %p72 = scmp.ne.s32.totalorder %s61, %s64
      %p73 = scmp.eq.s32.totalorder %s42, 1
      %p74 = por %p72, %p73
      %p75 = scmp.ne.s32.totalorder %s64, %s65
      %p76 = scmp.eq.s32.totalorder %s42, 0
      %p77 = por %p75, %p76
      %p78 = scmp.ne.s32.totalorder %s64, %s65
      %p79 = scmp.eq.s32.totalorder %s43, 1
      %p80 = por %p78, %p79
      %p82 = scmp.ne.s32.totalorder %s65, %s81
      %p83 = scmp.eq.s32.totalorder %s43, 0
      %p84 = por %p82, %p83
      %s85 = ssub.s32 %s44, %s56
      %p86 = scmp.eq.s32.totalorder %s85, 0
      %s88 = sadd.s32 %s87, 1
      %s89 = scalar_select %p86, %s87, %s88
      %p92 = pneg %p86
      %p93 = scmp.eq.s32.totalorder %s37, 1
      %p94 = por %p92, %p93
      %p95 = scmp.ne.s32.totalorder %s87, %s90
      %p96 = scmp.eq.s32.totalorder %s37, 0
      %p97 = por %p95, %p96
      %p98 = scmp.ne.s32.totalorder %s87, %s90
      %p99 = scmp.eq.s32.totalorder %s42, 1
      %p100 = por %p98, %p99
      %p101 = scmp.ne.s32.totalorder %s90, %s91
      %p102 = scmp.eq.s32.totalorder %s42, 0
      %p103 = por %p101, %p102
      %p104 = scmp.ne.s32.totalorder %s90, %s91
      %p105 = scmp.eq.s32.totalorder %s43, 1
      %p106 = por %p104, %p105
      %p108 = scmp.ne.s32.totalorder %s91, %s107
      %p109 = scmp.eq.s32.totalorder %s43, 0
      %p110 = por %p108, %p109
      %s111 = ssub.s32 %s44, %s56
      %p112 = scmp.eq.s32.totalorder %s111, 0
      %s114 = sadd.s32 %s113, 1
      %s115 = scalar_select %p112, %s113, %s114
      %p118 = pneg %p112
      %p119 = scmp.eq.s32.totalorder %s37, 1
      %p120 = por %p118, %p119
      %p121 = scmp.ne.s32.totalorder %s113, %s116
      %p122 = scmp.eq.s32.totalorder %s37, 0
      %p123 = por %p121, %p122
      %p124 = scmp.ne.s32.totalorder %s113, %s116
      %p125 = scmp.eq.s32.totalorder %s42, 1
      %p126 = por %p124, %p125
      %p127 = scmp.ne.s32.totalorder %s116, %s117
      %p128 = scmp.eq.s32.totalorder %s42, 0
      %p129 = por %p127, %p128
      %p130 = scmp.ne.s32.totalorder %s116, %s117
      %p131 = scmp.eq.s32.totalorder %s43, 1
      %p132 = por %p130, %p131
      %p134 = scmp.ne.s32.totalorder %s117, %s133
      %p135 = scmp.eq.s32.totalorder %s43, 0
      %p136 = por %p134, %p135
      %s137 = ssub.s32 %s45, %s52
      %p138 = scmp.eq.s32.totalorder %s137, 0
      %s140 = sadd.s32 %s139, 1
      %s141 = scalar_select %p138, %s139, %s140
      %p144 = pneg %p138
      %p145 = scmp.eq.s32.totalorder %s37, 1
      %p146 = por %p144, %p145
      %p147 = scmp.ne.s32.totalorder %s139, %s142
      %p148 = scmp.eq.s32.totalorder %s37, 0
      %p149 = por %p147, %p148
      %p150 = scmp.ne.s32.totalorder %s139, %s142
      %p151 = scmp.eq.s32.totalorder %s42, 1
      %p152 = por %p150, %p151
      %p153 = scmp.ne.s32.totalorder %s142, %s143
      %p154 = scmp.eq.s32.totalorder %s42, 0
      %p155 = por %p153, %p154
      %p156 = scmp.ne.s32.totalorder %s142, %s143
      %p157 = scmp.eq.s32.totalorder %s43, 1
      %p158 = por %p156, %p157
      %p160 = scmp.ne.s32.totalorder %s143, %s159
      %p161 = scmp.eq.s32.totalorder %s43, 0
      %p162 = por %p160, %p161
      %s164 = sadd.s32 %s163, 1
      %p167 = scmp.eq.s32.totalorder %s37, 1
      %p168 = scmp.ne.s32.totalorder %s163, %s165
      %p169 = scmp.eq.s32.totalorder %s37, 0
      %p170 = por %p168, %p169
      %p171 = scmp.ne.s32.totalorder %s163, %s165
      %p172 = scmp.eq.s32.totalorder %s42, 1
      %p173 = por %p171, %p172
      %p174 = scmp.ne.s32.totalorder %s165, %s166
      %p175 = scmp.eq.s32.totalorder %s42, 0
      %p176 = por %p174, %p175
      %p177 = scmp.ne.s32.totalorder %s165, %s166
      %p178 = scmp.eq.s32.totalorder %s43, 1
      %p179 = por %p177, %p178
      %p181 = scmp.ne.s32.totalorder %s166, %s180
      %p182 = scmp.eq.s32.totalorder %s43, 0
      %p183 = por %p181, %p182
      %s185 = sadd.s32 %s184, 1
      %p188 = scmp.eq.s32.totalorder %s37, 1
      %p189 = scmp.ne.s32.totalorder %s184, %s186
      %p190 = scmp.eq.s32.totalorder %s37, 0
      %p191 = por %p189, %p190
      %p192 = scmp.ne.s32.totalorder %s184, %s186
      %p193 = scmp.eq.s32.totalorder %s42, 1
      %p194 = por %p192, %p193
      %p195 = scmp.ne.s32.totalorder %s186, %s187
      %p196 = scmp.eq.s32.totalorder %s42, 0
      %p197 = por %p195, %p196
      %p198 = scmp.ne.s32.totalorder %s186, %s187
      %p199 = scmp.eq.s32.totalorder %s43, 1
      %p200 = por %p198, %p199
      %p202 = scmp.ne.s32.totalorder %s187, %s201
      %p203 = scmp.eq.s32.totalorder %s43, 0
      %p204 = por %p202, %p203
      %s206 = sadd.s32 %s205, 1
      %p209 = scmp.eq.s32.totalorder %s37, 1
      %p210 = scmp.ne.s32.totalorder %s205, %s207
      %p211 = scmp.eq.s32.totalorder %s37, 0
      %p212 = por %p210, %p211
      %p213 = scmp.ne.s32.totalorder %s205, %s207
      %p214 = scmp.eq.s32.totalorder %s42, 1
      %p215 = por %p213, %p214
      %p216 = scmp.ne.s32.totalorder %s207, %s208
      %p217 = scmp.eq.s32.totalorder %s42, 0
      %p218 = por %p216, %p217
      %p219 = scmp.ne.s32.totalorder %s207, %s208
      %p220 = scmp.eq.s32.totalorder %s43, 1
      %p221 = por %p219, %p220
      %p223 = scmp.ne.s32.totalorder %s208, %s222
      %p224 = scmp.eq.s32.totalorder %s43, 0
      %p225 = por %p223, %p224
      %s227 = sadd.s32 %s226, 1
      %p230 = scmp.eq.s32.totalorder %s37, 1
      %p231 = scmp.ne.s32.totalorder %s226, %s228
      %p232 = scmp.eq.s32.totalorder %s37, 0
      %p233 = por %p231, %p232
      %p234 = scmp.ne.s32.totalorder %s226, %s228
      %p235 = scmp.eq.s32.totalorder %s42, 1
      %p236 = por %p234, %p235
      %p237 = scmp.ne.s32.totalorder %s228, %s229
      %p238 = scmp.eq.s32.totalorder %s42, 0
      %p239 = por %p237, %p238
      %p240 = scmp.ne.s32.totalorder %s228, %s229
      %p241 = scmp.eq.s32.totalorder %s43, 1
      %p242 = por %p240, %p241
      %p244 = scmp.ne.s32.totalorder %s229, %s243
      %p245 = scmp.eq.s32.totalorder %s43, 0
      %p246 = por %p244, %p245
      %s248 = sadd.s32 %s247, 1
      %p251 = scmp.eq.s32.totalorder %s37, 1
      %p252 = scmp.ne.s32.totalorder %s247, %s249
      %p253 = scmp.eq.s32.totalorder %s37, 0
      %p254 = por %p252, %p253
      %p255 = scmp.ne.s32.totalorder %s247, %s249
      %p256 = scmp.eq.s32.totalorder %s42, 1
      %p257 = por %p255, %p256
      %p258 = scmp.ne.s32.totalorder %s249, %s250
      %p259 = scmp.eq.s32.totalorder %s42, 0
      %p260 = por %p258, %p259
      %p261 = scmp.ne.s32.totalorder %s249, %s250
      %p262 = scmp.eq.s32.totalorder %s43, 1
      %p263 = por %p261, %p262
      %p265 = scmp.ne.s32.totalorder %s250, %s264
      %p266 = scmp.eq.s32.totalorder %s43, 0
      %p267 = por %p265, %p266
      %s269 = sadd.s32 %s268, 1
      %p272 = scmp.eq.s32.totalorder %s37, 1
      %p273 = scmp.ne.s32.totalorder %s268, %s270
      %p274 = scmp.eq.s32.totalorder %s37, 0
      %p275 = por %p273, %p274
      %p276 = scmp.ne.s32.totalorder %s268, %s270
      %p277 = scmp.eq.s32.totalorder %s42, 1
      %p278 = por %p276, %p277
      %p279 = scmp.ne.s32.totalorder %s270, %s271
      %p280 = scmp.eq.s32.totalorder %s42, 0
      %p281 = por %p279, %p280
      %p282 = scmp.ne.s32.totalorder %s270, %s271
      %p283 = scmp.eq.s32.totalorder %s43, 1
      %p284 = por %p282, %p283
      %p286 = scmp.ne.s32.totalorder %s271, %s285
      %p287 = scmp.eq.s32.totalorder %s43, 0
      %p288 = por %p286, %p287
      %s290 = sadd.s32 %s289, 1
      %p293 = scmp.eq.s32.totalorder %s37, 1
      %p294 = scmp.ne.s32.totalorder %s289, %s291
      %p295 = scmp.eq.s32.totalorder %s37, 0
      %p296 = por %p294, %p295
      %p297 = scmp.ne.s32.totalorder %s289, %s291
      %p298 = scmp.eq.s32.totalorder %s42, 1
      %p299 = por %p297, %p298
      %p300 = scmp.ne.s32.totalorder %s291, %s292
      %p301 = scmp.eq.s32.totalorder %s42, 0
      %p302 = por %p300, %p301
      %p303 = scmp.ne.s32.totalorder %s291, %s292
      %p304 = scmp.eq.s32.totalorder %s43, 1
      %p305 = por %p303, %p304
      %p307 = scmp.ne.s32.totalorder %s292, %s306
      %p308 = scmp.eq.s32.totalorder %s43, 0
      %p309 = por %p307, %p308
      %s311 = sadd.s32 %s310, 1
      %p314 = scmp.eq.s32.totalorder %s37, 1
      %p315 = scmp.ne.s32.totalorder %s310, %s312
      %p316 = scmp.eq.s32.totalorder %s37, 0
      %p317 = por %p315, %p316
      %p318 = scmp.ne.s32.totalorder %s310, %s312
      %p319 = scmp.eq.s32.totalorder %s42, 1
      %p320 = por %p318, %p319
      %p321 = scmp.ne.s32.totalorder %s312, %s313
      %p322 = scmp.eq.s32.totalorder %s42, 0
      %p323 = por %p321, %p322
      %p324 = scmp.ne.s32.totalorder %s312, %s313
      %p325 = scmp.eq.s32.totalorder %s43, 1
      %p326 = por %p324, %p325
      %p328 = scmp.ne.s32.totalorder %s313, %s327
      %p329 = scmp.eq.s32.totalorder %s43, 0
      %p330 = por %p328, %p329
      %s331 = ssub.s32 %s44, %s56
      %s332 = ssub.s32 %s45, %s52
      %s333 = sor.u32 %s331, %s332
      %p334 = scmp.eq.s32.totalorder %s333, 0
      %s336 = sadd.s32 %s335, 1
      %s337 = scalar_select %p334, %s335, %s336
      %p340 = pneg %p334
      %p341 = scmp.eq.s32.totalorder %s37, 1
      %p342 = por %p340, %p341
      %p343 = scmp.ne.s32.totalorder %s335, %s338
      %p344 = scmp.eq.s32.totalorder %s37, 0
      %p345 = por %p343, %p344
      %p346 = scmp.ne.s32.totalorder %s335, %s338
      %p347 = scmp.eq.s32.totalorder %s42, 1
      %p348 = por %p346, %p347
      %p349 = scmp.ne.s32.totalorder %s338, %s339
      %p350 = scmp.eq.s32.totalorder %s42, 0
      %p351 = por %p349, %p350
      %p352 = scmp.ne.s32.totalorder %s338, %s339
      %p353 = scmp.eq.s32.totalorder %s43, 1
      %p354 = por %p352, %p353
      %p356 = scmp.ne.s32.totalorder %s339, %s355
      %p357 = scmp.eq.s32.totalorder %s43, 0
      %p358 = por %p356, %p357
      %s359 = ssub.s32 %s44, %s56
      %s360 = ssub.s32 %s45, %s52
      %s361 = sor.u32 %s359, %s360
      %p362 = scmp.eq.s32.totalorder %s361, 0
      %s364 = sadd.s32 %s363, 1
      %s365 = scalar_select %p362, %s363, %s364
      %p368 = pneg %p362
      %p369 = scmp.eq.s32.totalorder %s37, 1
      %p370 = por %p368, %p369
      %p371 = scmp.ne.s32.totalorder %s363, %s366
      %p372 = scmp.eq.s32.totalorder %s37, 0
      %p373 = por %p371, %p372
      %p374 = scmp.ne.s32.totalorder %s363, %s366
      %p375 = scmp.eq.s32.totalorder %s42, 1
      %p376 = por %p374, %p375
      %p377 = scmp.ne.s32.totalorder %s366, %s367
      %p378 = scmp.eq.s32.totalorder %s42, 0
      %p379 = por %p377, %p378
      %p380 = scmp.ne.s32.totalorder %s366, %s367
      %p381 = scmp.eq.s32.totalorder %s43, 1
      %p382 = por %p380, %p381
      %p384 = scmp.ne.s32.totalorder %s367, %s383
      %p385 = scmp.eq.s32.totalorder %s43, 0
      %p386 = por %p384, %p385
      %p387 = scmp.le.s32.totalorder 1, %s37
      %p388 = scmp.lt.s32.totalorder %s37, 3
      %p389 = pnand %p387, %p388
      %p390 = pneg %p389
      // Predicated region
      $region9: #{tpu_custom_call.1} parent=5 // pred_check
        _
      $region10: #{tpu_custom_call.1} parent=5 // pred_check_branch
        %392 = sbr.rel (%p389) target = $region12
      $region11: #{tpu_custom_call.1} parent=5 // pred_region
        %s393 = ssub.s32 %s37, 1
        // Predicated region
        $region13: #{tpu_custom_call.1} parent=11 // pred_check
          %p394 = pneg %p155
        $region14: #{tpu_custom_call.1} parent=11 // pred_check_branch
          %396 = sbr.rel (%p394) target = $region16
        $region15: #{tpu_custom_call.1} parent=11 // pred_region
          %s398 = ssub.s32 128, 128
          %399 = vsyncadd [#allocation11], %s398
          %s400 = smul.addr %s47, 128
          %s401 = scalar_lea.hbm %s3, %s400
          %s403 = sshll.u32 [#allocation10], 4
          %s404 = int_to_ptr.vmem [resolvable:$true] %s403
          %406 = dma.hbm_to_vmem [thread:$0]  %s401, 128, %s404, [#allocation11]
        $region16: #{tpu_custom_call.1} parent=11 // pred_fallthru
          _
        // Predicated region
        $region17: #{tpu_custom_call.1} parent=11 // pred_check
          %p407 = pneg %p176
        $region18: #{tpu_custom_call.1} parent=11 // pred_check_branch
          %409 = sbr.rel (%p407) target = $region20
        $region19: #{tpu_custom_call.1} parent=11 // pred_region
          %s411 = ssub.s32 256, 256
          %412 = vsyncadd [#allocation11], %s411
          %s413 = sshll.u32 [#allocation12], 4
          %s414 = int_to_ptr.vmem [resolvable:$true] %s413
          %419 = dma.hbm_to_vmem [thread:$0]  %s4, 256, %s414, [#allocation11], 64, 64, 4
        $region20: #{tpu_custom_call.1} parent=11 // pred_fallthru
          _
        // Predicated region
        $region21: #{tpu_custom_call.1} parent=11 // pred_check
          %p420 = pneg %p197
        $region22: #{tpu_custom_call.1} parent=11 // pred_check_branch
          %422 = sbr.rel (%p420) target = $region24
        $region23: #{tpu_custom_call.1} parent=11 // pred_region
          %s424 = ssub.s32 16, 16
          %425 = vsyncadd [#allocation14], %s424
          %s427 = sshll.u32 [#allocation13], 4
          %s428 = int_to_ptr.vmem [resolvable:$true] %s427
          %430 = dma.hbm_to_vmem [thread:$0]  %s5, 16, %s428, [#allocation14]
        $region24: #{tpu_custom_call.1} parent=11 // pred_fallthru
          _
        // Predicated region
        $region25: #{tpu_custom_call.1} parent=11 // pred_check
          %p431 = pneg %p218
        $region26: #{tpu_custom_call.1} parent=11 // pred_check_branch
          %433 = sbr.rel (%p431) target = $region28
        $region27: #{tpu_custom_call.1} parent=11 // pred_region
          %s435 = ssub.s32 256, 256
          %436 = vsyncadd [#allocation14], %s435
          %s437 = sshll.u32 [#allocation15], 4
          %s438 = int_to_ptr.vmem [resolvable:$true] %s437
          %443 = dma.hbm_to_vmem [thread:$0]  %s6, 256, %s438, [#allocation14], 64, 64, 4
        $region28: #{tpu_custom_call.1} parent=11 // pred_fallthru
          _
        // Predicated region
        $region29: #{tpu_custom_call.1} parent=11 // pred_check
          %p444 = pneg %p239
        $region30: #{tpu_custom_call.1} parent=11 // pred_check_branch
          %446 = sbr.rel (%p444) target = $region32
        $region31: #{tpu_custom_call.1} parent=11 // pred_region
          %s448 = ssub.s32 16, 16
          %449 = vsyncadd [#allocation17], %s448
          %s451 = sshll.u32 [#allocation16], 4
          %s452 = int_to_ptr.vmem [resolvable:$true] %s451
          %454 = dma.hbm_to_vmem [thread:$0]  %s7, 16, %s452, [#allocation17]
        $region32: #{tpu_custom_call.1} parent=11 // pred_fallthru
          _
        // Predicated region
        $region33: #{tpu_custom_call.1} parent=11 // pred_check
          %p455 = pneg %p260
        $region34: #{tpu_custom_call.1} parent=11 // pred_check_branch
          %457 = sbr.rel (%p455) target = $region36
        $region35: #{tpu_custom_call.1} parent=11 // pred_region
          %s459 = ssub.s32 256, 256
          %460 = vsyncadd [#allocation17], %s459
          %s461 = sshll.u32 [#allocation18], 4
          %s462 = int_to_ptr.vmem [resolvable:$true] %s461
          %467 = dma.hbm_to_vmem [thread:$0]  %s8, 256, %s462, [#allocation17], 64, 64, 4
        $region36: #{tpu_custom_call.1} parent=11 // pred_fallthru
          _
        // Predicated region
        $region37: #{tpu_custom_call.1} parent=11 // pred_check
          %p468 = pneg %p281
        $region38: #{tpu_custom_call.1} parent=11 // pred_check_branch
          %470 = sbr.rel (%p468) target = $region40
        $region39: #{tpu_custom_call.1} parent=11 // pred_region
          %s472 = ssub.s32 16, 16
          %473 = vsyncadd [#allocation20], %s472
          %s475 = sshll.u32 [#allocation19], 4
          %s476 = int_to_ptr.vmem [resolvable:$true] %s475
          %478 = dma.hbm_to_vmem [thread:$0]  %s9, 16, %s476, [#allocation20]
        $region40: #{tpu_custom_call.1} parent=11 // pred_fallthru
          _
        // Predicated region
        $region41: #{tpu_custom_call.1} parent=11 // pred_check
          %p479 = pneg %p302
        $region42: #{tpu_custom_call.1} parent=11 // pred_check_branch
          %481 = sbr.rel (%p479) target = $region44
        $region43: #{tpu_custom_call.1} parent=11 // pred_region
          %s483 = ssub.s32 256, 256
          %484 = vsyncadd [#allocation20], %s483
          %s485 = sshll.u32 [#allocation21], 4
          %s486 = int_to_ptr.vmem [resolvable:$true] %s485
          %491 = dma.hbm_to_vmem [thread:$0]  %s10, 256, %s486, [#allocation20], 64, 64, 4
        $region44: #{tpu_custom_call.1} parent=11 // pred_fallthru
          _
        // Predicated region
        $region45: #{tpu_custom_call.1} parent=11 // pred_check
          %p492 = pneg %p323
        $region46: #{tpu_custom_call.1} parent=11 // pred_check_branch
          %494 = sbr.rel (%p492) target = $region48
        $region47: #{tpu_custom_call.1} parent=11 // pred_region
          %s496 = ssub.s32 16, 16
          %497 = vsyncadd [#allocation23], %s496
          %s499 = sshll.u32 [#allocation22], 4
          %s500 = int_to_ptr.vmem [resolvable:$true] %s499
          %502 = dma.hbm_to_vmem [thread:$0]  %s11, 16, %s500, [#allocation23]
        $region48: #{tpu_custom_call.1} parent=11 // pred_fallthru
          _
      $region12: #{tpu_custom_call.1} parent=5 // pred_fallthru
        _
      %p503 = scmp.lt.s32.totalorder %s37, 2
      // Predicated region
      $region49: #{tpu_custom_call.1} parent=5 // pred_check
        %p504 = pneg %p503
      $region50: #{tpu_custom_call.1} parent=5 // pred_check_branch
        %506 = sbr.rel (%p504) target = $region52
      $region51: #{tpu_custom_call.1} parent=5 // pred_region
        // Predicated region
        $region53: #{tpu_custom_call.1} parent=51 // pred_check
          %p507 = pneg %p71
        $region54: #{tpu_custom_call.1} parent=51 // pred_check_branch
          %509 = sbr.rel (%p507) target = $region56
        $region55: #{tpu_custom_call.1} parent=51 // pred_region
          %s510 = sand.u32 %s61, 1
          %s511 = scalar_lea.sflag [#allocation5], %s510
          %s512 = sand.u32 %s61, 1
          %s513 = smul.addr %s512, 8
          %s514 = scalar_lea.vmem [#allocation4], %s513
          %s516 = ssub.s32 128, 128
          %517 = vsyncadd %s511, %s516
          %s518 = sadd.s32 %s45, %s44
          %s519 = smul.addr %s518, 128
          %s520 = scalar_lea.hbm %s0, %s519
          %s522 = sshll.u32 %s514, 4
          %s523 = int_to_ptr.vmem [resolvable:$true] %s522
          %525 = dma.hbm_to_vmem [thread:$0]  %s520, 128, %s523, %s511
        $region56: #{tpu_custom_call.1} parent=51 // pred_fallthru
          _
        // Predicated region
        $region57: #{tpu_custom_call.1} parent=51 // pred_check
          %p526 = pneg %p97
        $region58: #{tpu_custom_call.1} parent=51 // pred_check_branch
          %528 = sbr.rel (%p526) target = $region60
        $region59: #{tpu_custom_call.1} parent=51 // pred_region
          %s529 = sand.u32 %s37, 1
          %s530 = scalar_lea.sflag [#allocation8], %s529
          %s531 = sand.u32 %s87, 1
          %s532 = smul.addr %s531, 8
          %s533 = scalar_lea.vmem [#allocation7], %s532
          %s535 = ssub.s32 128, 128
          %536 = vsyncadd %s530, %s535
          %s537 = smul.addr %s44, 128
          %s538 = scalar_lea.hbm %s1, %s537
          %s540 = sshll.u32 %s533, 4
          %s541 = int_to_ptr.vmem [resolvable:$true] %s540
          %543 = dma.hbm_to_vmem [thread:$0]  %s538, 128, %s541, %s530
        $region60: #{tpu_custom_call.1} parent=51 // pred_fallthru
          _
        // Predicated region
        $region61: #{tpu_custom_call.1} parent=51 // pred_check
          %p544 = pneg %p123
        $region62: #{tpu_custom_call.1} parent=51 // pred_check_branch
          %546 = sbr.rel (%p544) target = $region64
        $region63: #{tpu_custom_call.1} parent=51 // pred_region
          %s547 = sand.u32 %s37, 1
          %s548 = scalar_lea.sflag [#allocation8], %s547
          %s549 = sand.u32 %s113, 1
          %s550 = smul.addr %s549, 8
          %s551 = scalar_lea.vmem [#allocation9], %s550
          %s553 = ssub.s32 128, 128
          %554 = vsyncadd %s548, %s553
          %s555 = smul.addr %s44, 128
          %s556 = scalar_lea.hbm %s2, %s555
          %s558 = sshll.u32 %s551, 4
          %s559 = int_to_ptr.vmem [resolvable:$true] %s558
          %561 = dma.hbm_to_vmem [thread:$0]  %s556, 128, %s559, %s548
        $region64: #{tpu_custom_call.1} parent=51 // pred_fallthru
          _
      $region52: #{tpu_custom_call.1} parent=5 // pred_fallthru
        _
      %p562 = scmp.le.s32.totalorder 1, %s37
      %p563 = scmp.lt.s32.totalorder %s37, 3
      %p564 = pnand %p562, %p563
      %p565 = pneg %p564
      // Predicated region
      $region65: #{tpu_custom_call.1} parent=5 // pred_check
        _
      $region66: #{tpu_custom_call.1} parent=5 // pred_check_branch
        %567 = sbr.rel (%p564) target = $region68
      $region67: #{tpu_custom_call.1} parent=5 // pred_region
        %s568 = ssub.s32 %s37, 1
        %s569 = sand.u32 %s64, 1
        %s570 = scalar_lea.sflag [#allocation5], %s569
        %s571 = sand.u32 %s64, 1
        %s572 = smul.addr %s571, 8
        %s573 = scalar_lea.vmem [#allocation4], %s572
        // Predicated region
        $region69: #{tpu_custom_call.1} parent=67 // pred_check
          %p574 = pneg %p77
        $region70: #{tpu_custom_call.1} parent=67 // pred_check_branch
          %576 = sbr.rel (%p574) target = $region72
        $region71: #{tpu_custom_call.1} parent=67 // pred_region
          %577 = dma.done %s570, 128
        $region72: #{tpu_custom_call.1} parent=67 // pred_fallthru
          _
        %s578 = sand.u32 %s42, 1
        %s579 = scalar_lea.sflag [#allocation8], %s578
        %s580 = sand.u32 %s90, 1
        %s581 = smul.addr %s580, 8
        %s582 = scalar_lea.vmem [#allocation7], %s581
        // Predicated region
        $region73: #{tpu_custom_call.1} parent=67 // pred_check
          %p583 = pneg %p103
        $region74: #{tpu_custom_call.1} parent=67 // pred_check_branch
          %585 = sbr.rel (%p583) target = $region76
        $region75: #{tpu_custom_call.1} parent=67 // pred_region
          %586 = dma.done %s579, 128
        $region76: #{tpu_custom_call.1} parent=67 // pred_fallthru
          _
        %s587 = sand.u32 %s42, 1
        %s588 = scalar_lea.sflag [#allocation8], %s587
        %s589 = sand.u32 %s116, 1
        %s590 = smul.addr %s589, 8
        %s591 = scalar_lea.vmem [#allocation9], %s590
        // Predicated region
        $region77: #{tpu_custom_call.1} parent=67 // pred_check
          %p592 = pneg %p129
        $region78: #{tpu_custom_call.1} parent=67 // pred_check_branch
          %594 = sbr.rel (%p592) target = $region80
        $region79: #{tpu_custom_call.1} parent=67 // pred_region
          %595 = dma.done %s588, 128
        $region80: #{tpu_custom_call.1} parent=67 // pred_fallthru
          _
        // Predicated region
        $region81: #{tpu_custom_call.1} parent=67 // pred_check
          %p596 = pneg %p155
        $region82: #{tpu_custom_call.1} parent=67 // pred_check_branch
          %598 = sbr.rel (%p596) target = $region84
        $region83: #{tpu_custom_call.1} parent=67 // pred_region
          %599 = dma.done [#allocation11], 128
        $region84: #{tpu_custom_call.1} parent=67 // pred_fallthru
          _
        // Predicated region
        $region85: #{tpu_custom_call.1} parent=67 // pred_check
          %p600 = pneg %p176
        $region86: #{tpu_custom_call.1} parent=67 // pred_check_branch
          %602 = sbr.rel (%p600) target = $region88
        $region87: #{tpu_custom_call.1} parent=67 // pred_region
          %603 = dma.done [#allocation11], 256
        $region88: #{tpu_custom_call.1} parent=67 // pred_fallthru
          _
        // Predicated region
        $region89: #{tpu_custom_call.1} parent=67 // pred_check
          %p604 = pneg %p197
        $region90: #{tpu_custom_call.1} parent=67 // pred_check_branch
          %606 = sbr.rel (%p604) target = $region92
        $region91: #{tpu_custom_call.1} parent=67 // pred_region
          %607 = dma.done [#allocation14], 16
        $region92: #{tpu_custom_call.1} parent=67 // pred_fallthru
          _
        // Predicated region
        $region93: #{tpu_custom_call.1} parent=67 // pred_check
          %p608 = pneg %p218
        $region94: #{tpu_custom_call.1} parent=67 // pred_check_branch
          %610 = sbr.rel (%p608) target = $region96
        $region95: #{tpu_custom_call.1} parent=67 // pred_region
          %611 = dma.done [#allocation14], 256
        $region96: #{tpu_custom_call.1} parent=67 // pred_fallthru
          _
        // Predicated region
        $region97: #{tpu_custom_call.1} parent=67 // pred_check
          %p612 = pneg %p239
        $region98: #{tpu_custom_call.1} parent=67 // pred_check_branch
          %614 = sbr.rel (%p612) target = $region100
        $region99: #{tpu_custom_call.1} parent=67 // pred_region
          %615 = dma.done [#allocation17], 16
        $region100: #{tpu_custom_call.1} parent=67 // pred_fallthru
          _
        // Predicated region
        $region101: #{tpu_custom_call.1} parent=67 // pred_check
          %p616 = pneg %p260
        $region102: #{tpu_custom_call.1} parent=67 // pred_check_branch
          %618 = sbr.rel (%p616) target = $region104
        $region103: #{tpu_custom_call.1} parent=67 // pred_region
          %619 = dma.done [#allocation17], 256
        $region104: #{tpu_custom_call.1} parent=67 // pred_fallthru
          _
        // Predicated region
        $region105: #{tpu_custom_call.1} parent=67 // pred_check
          %p620 = pneg %p281
        $region106: #{tpu_custom_call.1} parent=67 // pred_check_branch
          %622 = sbr.rel (%p620) target = $region108
        $region107: #{tpu_custom_call.1} parent=67 // pred_region
          %623 = dma.done [#allocation20], 16
        $region108: #{tpu_custom_call.1} parent=67 // pred_fallthru
          _
        // Predicated region
        $region109: #{tpu_custom_call.1} parent=67 // pred_check
          %p624 = pneg %p302
        $region110: #{tpu_custom_call.1} parent=67 // pred_check_branch
          %626 = sbr.rel (%p624) target = $region112
        $region111: #{tpu_custom_call.1} parent=67 // pred_region
          %627 = dma.done [#allocation20], 256
        $region112: #{tpu_custom_call.1} parent=67 // pred_fallthru
          _
        // Predicated region
        $region113: #{tpu_custom_call.1} parent=67 // pred_check
          %p628 = pneg %p323
        $region114: #{tpu_custom_call.1} parent=67 // pred_check_branch
          %630 = sbr.rel (%p628) target = $region116
        $region115: #{tpu_custom_call.1} parent=67 // pred_region
          %631 = dma.done [#allocation23], 16
        $region116: #{tpu_custom_call.1} parent=67 // pred_fallthru
          _
        %s632 = sand.u32 %s64, 1
        %s633 = scalar_lea.sflag [#allocation5], %s632
        %s634 = sand.u32 %s64, 1
        %s635 = smul.addr %s634, 8
        %s636 = scalar_lea.vmem [#allocation4], %s635
        %p637 = pneg %p77
        %p638 = pneg %p74
        %s639 = sand.u32 %s42, 1
        %s640 = scalar_lea.sflag [#allocation8], %s639
        %s641 = sand.u32 %s90, 1
        %s642 = smul.addr %s641, 8
        %s643 = scalar_lea.vmem [#allocation7], %s642
        %p644 = pneg %p103
        %p645 = pneg %p100
        %s646 = sand.u32 %s42, 1
        %s647 = scalar_lea.sflag [#allocation8], %s646
        %s648 = sand.u32 %s116, 1
        %s649 = smul.addr %s648, 8
        %s650 = scalar_lea.vmem [#allocation9], %s649
        %p651 = pneg %p129
        %p652 = pneg %p126
        %p653 = pneg %p155
        %p654 = pneg %p152
        %p655 = pneg %p176
        %p656 = pneg %p173
        %p657 = pneg %p197
        %p658 = pneg %p194
        %p659 = pneg %p218
        %p660 = pneg %p215
        %p661 = pneg %p239
        %p662 = pneg %p236
        %p663 = pneg %p260
        %p664 = pneg %p257
        %p665 = pneg %p281
        %p666 = pneg %p278
        %p667 = pneg %p302
        %p668 = pneg %p299
        %p669 = pneg %p323
        %p670 = pneg %p320
        %p671 = pneg %p351
        %p672 = pneg %p348
        %s673 = sand.u32 %s338, 1
        %s674 = scalar_lea.sflag [#allocation6], %s673
        %s675 = sand.u32 %s338, 1
        %s676 = smul.addr %s675, 8
        %s677 = scalar_lea.vmem [#allocation24], %s676
        %p678 = pneg %p379
        %p679 = pneg %p376
        %s680 = sand.u32 %s366, 1
        %s681 = scalar_lea.sflag [#allocation26], %s680
        %s682 = sand.u32 %s366, 1
        %s683 = smul.addr %s682, 8
        %s684 = scalar_lea.vmem [#allocation25], %s683
        %v686 = vld [vmem:[%s573] sm:$0xff]
        %v687 = vpack.c.bf16 %v686, %v686
        %v688 = vld [vmem:[%s582] sm:$0xff]
        %v689 = vpack.c.bf16 %v688, %v688
        %v690 = vld [vmem:[%s591] sm:$0xff]
        %v691 = vpack.c.bf16 %v690, %v690
        %v692 = vld [vmem:[#allocation10] sm:$0xff]
        %v693 = vld [vmem:[#allocation12] sm:$0xf]
        %v694 = vld [vmem:[#allocation12 + $0x4] sm:$0xf]
        %v695 = vld [vmem:[#allocation12 + $0x8] sm:$0xf]
        %v696 = vld [vmem:[#allocation12 + $0xc] sm:$0xf]
        %v697 = vld [vmem:[#allocation13] sm:$0x1]
        %v699 = vlaneseq
        %v700 = vshrl.u32 %v699, 7
        %v701 = vsub.s32 0, %v700
        %v702 = vrot.slane %v697, %v701
        %v708 = vunpack.c.l.b16 %v693
        %v709 = vunpack.c.l.b16 %v694
        %v710 = vunpack.c.l.b16 %v695
        %v711 = vunpack.c.l.b16 %v696
        %v712 = vpack.c.b16 %v709, %v708
        %v713 = vpack.c.b16 %v711, %v710
        %vm716 = vcmask 261120
        %v718 = vsel %vm716, %v687, 0
        %720 = vmatprep.subr.bf16.mxu0 0
        %721 = vmatpush1.bf16.msra.mxu0 %v712
        %722 = vmatprep.subr.bf16.mxu0 0
        %723 = vmatpush1.bf16.msra.mxu0 %v713
        %724 = vmatprep.subr.bf16.mxu0 0
        %725 = vmatpush1.bf16.msra.mxu0 0
        %726 = vmatprep.subr.bf16.mxu0 0
        %727 = vmatpush1.bf16.msra.mxu0 0
        %728 = vmatprep.subr.bf16.mxu0 0
        %729 = vmatpush1.bf16.msra.mxu0 0
        %730 = vmatprep.subr.bf16.mxu0 0
        %731 = vmatpush1.bf16.msra.mxu0 0
        %732 = vmatprep.subr.bf16.mxu0 0
        %733 = vmatpush1.bf16.msra.mxu0 0
        %734 = vmatprep.subr.bf16.mxu0 0
        %735 = vmatpush1.bf16.msra.mxu0 0
        %736 = vmatprep.subr.bf16.mxu0 0
        %737 = vmatpush1.bf16.msra.mxu0 0
        %738 = vmatprep.subr.bf16.mxu0 0
        %739 = vmatpush1.bf16.msra.mxu0 0
        %740 = vmatprep.subr.bf16.mxu0 0
        %741 = vmatpush1.bf16.msra.mxu0 0
        %742 = vmatprep.subr.bf16.mxu0 0
        %743 = vmatpush1.bf16.msra.mxu0 0
        %744 = vmatprep.subr.bf16.mxu0 0
        %745 = vmatpush1.bf16.msra.mxu0 0
        %746 = vmatprep.subr.bf16.mxu0 0
        %747 = vmatpush1.bf16.msra.mxu0 0
        %748 = vmatprep.subr.bf16.mxu0 0
        %749 = vmatpush1.bf16.msra.mxu0 0
        %750 = vmatprep.subr.bf16.mxu0 0
        %751 = vmatpush1.bf16.msra.mxu0 0
        %752 = vmatprep.mubr.bf16.mxu0 0
        %753 = vmatmul.mubr.bf16.gmra.mrb[0].mxu0 %v718
        %v754 = vpop.f32.mrb[0].mxu0
        %v755 = vadd.f32 %v702, %v754
        %v756 = vpop.f32.mrb[0].mxu0
        %v757 = vpop.f32.mrb[0].mxu0
        %v758 = vpop.f32.mrb[0].mxu0
        %759 = vdwg.mxu0
        %v760 = vld [vmem:[#allocation15] sm:$0xf]
        %v761 = vld [vmem:[#allocation15 + $0x4] sm:$0xf]
        %v762 = vld [vmem:[#allocation15 + $0x8] sm:$0xf]
        %v763 = vld [vmem:[#allocation15 + $0xc] sm:$0xf]
        %v764 = vld [vmem:[#allocation16] sm:$0x1]
        %v766 = vlaneseq
        %v767 = vshrl.u32 %v766, 7
        %v768 = vsub.s32 0, %v767
        %v769 = vrot.slane %v764, %v768
        %v775 = vunpack.c.l.b16 %v760
        %v776 = vunpack.c.l.b16 %v761
        %v777 = vunpack.c.l.b16 %v762
        %v778 = vunpack.c.l.b16 %v763
        %v779 = vpack.c.b16 %v776, %v775
        %v780 = vpack.c.b16 %v778, %v777
        %v784 = vsel %vm716, %v689, 0
        %786 = vmatprep.subr.bf16.mxu0 0
        %787 = vmatpush1.bf16.msra.mxu0 %v779
        %788 = vmatprep.subr.bf16.mxu0 0
        %789 = vmatpush1.bf16.msra.mxu0 %v780
        %790 = vmatprep.subr.bf16.mxu0 0
        %791 = vmatpush1.bf16.msra.mxu0 0
        %792 = vmatprep.subr.bf16.mxu0 0
        %793 = vmatpush1.bf16.msra.mxu0 0
        %794 = vmatprep.subr.bf16.mxu0 0
        %795 = vmatpush1.bf16.msra.mxu0 0
        %796 = vmatprep.subr.bf16.mxu0 0
        %797 = vmatpush1.bf16.msra.mxu0 0
        %798 = vmatprep.subr.bf16.mxu0 0
        %799 = vmatpush1.bf16.msra.mxu0 0
        %800 = vmatprep.subr.bf16.mxu0 0
        %801 = vmatpush1.bf16.msra.mxu0 0
        %802 = vmatprep.subr.bf16.mxu0 0
        %803 = vmatpush1.bf16.msra.mxu0 0
        %804 = vmatprep.subr.bf16.mxu0 0
        %805 = vmatpush1.bf16.msra.mxu0 0
        %806 = vmatprep.subr.bf16.mxu0 0
        %807 = vmatpush1.bf16.msra.mxu0 0
        %808 = vmatprep.subr.bf16.mxu0 0
        %809 = vmatpush1.bf16.msra.mxu0 0
        %810 = vmatprep.subr.bf16.mxu0 0
        %811 = vmatpush1.bf16.msra.mxu0 0
        %812 = vmatprep.subr.bf16.mxu0 0
        %813 = vmatpush1.bf16.msra.mxu0 0
        %814 = vmatprep.subr.bf16.mxu0 0
        %815 = vmatpush1.bf16.msra.mxu0 0
        %816 = vmatprep.subr.bf16.mxu0 0
        %817 = vmatpush1.bf16.msra.mxu0 0
        %818 = vmatprep.mubr.bf16.mxu0 0
        %819 = vmatmul.mubr.bf16.gmra.mrb[0].mxu0 %v784
        %v820 = vpop.f32.mrb[0].mxu0
        %v821 = vadd.f32 %v769, %v820
        %v822 = vpop.f32.mrb[0].mxu0
        %v823 = vpop.f32.mrb[0].mxu0
        %v824 = vpop.f32.mrb[0].mxu0
        %825 = vdwg.mxu0
        %v826 = vld [vmem:[#allocation18] sm:$0xf]
        %v827 = vld [vmem:[#allocation18 + $0x4] sm:$0xf]
        %v828 = vld [vmem:[#allocation18 + $0x8] sm:$0xf]
        %v829 = vld [vmem:[#allocation18 + $0xc] sm:$0xf]
        %v830 = vld [vmem:[#allocation19] sm:$0x1]
        %v832 = vlaneseq
        %v833 = vshrl.u32 %v832, 7
        %v834 = vsub.s32 0, %v833
        %v835 = vrot.slane %v830, %v834
        %v841 = vunpack.c.l.b16 %v826
        %v842 = vunpack.c.l.b16 %v827
        %v843 = vunpack.c.l.b16 %v828
        %v844 = vunpack.c.l.b16 %v829
        %v845 = vpack.c.b16 %v842, %v841
        %v846 = vpack.c.b16 %v844, %v843
        %v850 = vsel %vm716, %v691, 0
        %852 = vmatprep.subr.bf16.mxu0 0
        %853 = vmatpush1.bf16.msra.mxu0 %v845
        %854 = vmatprep.subr.bf16.mxu0 0
        %855 = vmatpush1.bf16.msra.mxu0 %v846
        %856 = vmatprep.subr.bf16.mxu0 0
        %857 = vmatpush1.bf16.msra.mxu0 0
        %858 = vmatprep.subr.bf16.mxu0 0
        %859 = vmatpush1.bf16.msra.mxu0 0
        %860 = vmatprep.subr.bf16.mxu0 0
        %861 = vmatpush1.bf16.msra.mxu0 0
        %862 = vmatprep.subr.bf16.mxu0 0
        %863 = vmatpush1.bf16.msra.mxu0 0
        %864 = vmatprep.subr.bf16.mxu0 0
        %865 = vmatpush1.bf16.msra.mxu0 0
        %866 = vmatprep.subr.bf16.mxu0 0
        %867 = vmatpush1.bf16.msra.mxu0 0
        %868 = vmatprep.subr.bf16.mxu0 0
        %869 = vmatpush1.bf16.msra.mxu0 0
        %870 = vmatprep.subr.bf16.mxu0 0
        %871 = vmatpush1.bf16.msra.mxu0 0
        %872 = vmatprep.subr.bf16.mxu0 0
        %873 = vmatpush1.bf16.msra.mxu0 0
        %874 = vmatprep.subr.bf16.mxu0 0
        %875 = vmatpush1.bf16.msra.mxu0 0
        %876 = vmatprep.subr.bf16.mxu0 0
        %877 = vmatpush1.bf16.msra.mxu0 0
        %878 = vmatprep.subr.bf16.mxu0 0
        %879 = vmatpush1.bf16.msra.mxu0 0
        %880 = vmatprep.subr.bf16.mxu0 0
        %881 = vmatpush1.bf16.msra.mxu0 0
        %882 = vmatprep.subr.bf16.mxu0 0
        %883 = vmatpush1.bf16.msra.mxu0 0
        %884 = vmatprep.mubr.bf16.mxu0 0
        %885 = vmatmul.mubr.bf16.gmra.mrb[0].mxu0 %v850
        %v886 = vpop.f32.mrb[0].mxu0
        %v887 = vadd.f32 %v835, %v886
        %v888 = vpop.f32.mrb[0].mxu0
        %v889 = vpop.f32.mrb[0].mxu0
        %v890 = vpop.f32.mrb[0].mxu0
        %891 = vdwg.mxu0
        %v892 = vmul.f32 %v755, 0.35355338
        %893 = vst.msk [vmem:[#allocation2] sm:$0xff] %vm716, 0.0
        %vm894 = vcmask 64512
        %895 = vst.msk [vmem:[#allocation3] sm:$0xff] %vm894, 0.0
        %v896 = vpack.c.bf16 %v892, %v892
        %v897 = vpack.c.bf16 %v821, %v821
        %v898 = vpack.c.bf16 %v887, %v887
        %v900 = vsel %vm894, %v896, 0
        %v903 = vsel %vm894, %v897, 0
        %905 = vmatprep.subr.bf16.mxu0 0
        %906 = vmatpush1.bf16.xpose.msra.mxu0 %v903
        %907 = vmatprep.subr.bf16.mxu0 0
        %908 = vmatpush1.bf16.xpose.msra.mxu0 0
        %909 = vmatprep.subr.bf16.mxu0 0
        %910 = vmatpush1.bf16.xpose.msra.mxu0 0
        %911 = vmatprep.subr.bf16.mxu0 0
        %912 = vmatpush1.bf16.xpose.msra.mxu0 0
        %913 = vmatprep.subr.bf16.mxu0 0
        %914 = vmatpush1.bf16.xpose.msra.mxu0 0
        %915 = vmatprep.subr.bf16.mxu0 0
        %916 = vmatpush1.bf16.xpose.msra.mxu0 0
        %917 = vmatprep.subr.bf16.mxu0 0
        %918 = vmatpush1.bf16.xpose.msra.mxu0 0
        %919 = vmatprep.subr.bf16.mxu0 0
        %920 = vmatpush1.bf16.xpose.msra.mxu0 0
        %921 = vmatprep.subr.bf16.mxu0 0
        %922 = vmatpush1.bf16.xpose.msra.mxu0 0
        %923 = vmatprep.subr.bf16.mxu0 0
        %924 = vmatpush1.bf16.xpose.msra.mxu0 0
        %925 = vmatprep.subr.bf16.mxu0 0
        %926 = vmatpush1.bf16.xpose.msra.mxu0 0
        %927 = vmatprep.subr.bf16.mxu0 0
        %928 = vmatpush1.bf16.xpose.msra.mxu0 0
        %929 = vmatprep.subr.bf16.mxu0 0
        %930 = vmatpush1.bf16.xpose.msra.mxu0 0
        %931 = vmatprep.subr.bf16.mxu0 0
        %932 = vmatpush1.bf16.xpose.msra.mxu0 0
        %933 = vmatprep.subr.bf16.mxu0 0
        %934 = vmatpush1.bf16.xpose.msra.mxu0 0
        %935 = vmatprep.subr.bf16.mxu0 0
        %936 = vmatpush1.bf16.xpose.msra.mxu0 0
        %937 = vmatprep.mubr.bf16.mxu0 0
        %938 = vmatmul.mubr.bf16.gmra.mrb[0].mxu0 %v900
        %v939 = vpop.f32.mrb[0].mxu0
        %v940 = vadd.f32 %v692, %v939
        %v941 = vpop.f32.mrb[0].mxu0
        %v942 = vpop.f32.mrb[0].mxu0
        %v943 = vpop.f32.mrb[0].mxu0
        %944 = vdwg.mxu0
        %v945 = vsel %vm894, %v940, -inf
        %946 = vmax.xlane.f32.xlu0 %v945
        %v947 = vpop.xlane.xlu0 %946
        %v948 = vsub.f32 %v940, %v947
        %v949 = vmul.f32 %v948, 1.442695
        %v950 = vpow.pop %v949
        %v951 = vsel %vm894, %v950, 0.0
        %952 = vadd.xlane.f32.xlu0 %v951
        %v953 = vpop.xlane.xlu0 %952
        %v954 = vrcp.pop %v953
        %v955 = vmul.f32 %v950, %v954
        %v956 = vld [vmem:[#allocation3] sm:$0xff]
        %v957 = vadd.f32 %v956, %v955
        %958 = vst.msk [vmem:[#allocation3] sm:$0xff] %vm894, %v957
        %v959 = vpack.c.bf16 %v955, %v955
        %v961 = vsel %vm894, %v959, 0
        %vm963 = vcmask 1043456
        %v965 = vsel %vm963, %v898, 0
        %967 = vmatprep.subr.bf16.mxu0 0
        %968 = vmatpush1.bf16.msra.mxu0 %v965
        %969 = vmatprep.subr.bf16.mxu0 0
        %970 = vmatpush1.bf16.msra.mxu0 0
        %971 = vmatprep.subr.bf16.mxu0 0
        %972 = vmatpush1.bf16.msra.mxu0 0
        %973 = vmatprep.subr.bf16.mxu0 0
        %974 = vmatpush1.bf16.msra.mxu0 0
        %975 = vmatprep.subr.bf16.mxu0 0
        %976 = vmatpush1.bf16.msra.mxu0 0
        %977 = vmatprep.subr.bf16.mxu0 0
        %978 = vmatpush1.bf16.msra.mxu0 0
        %979 = vmatprep.subr.bf16.mxu0 0
        %980 = vmatpush1.bf16.msra.mxu0 0
        %981 = vmatprep.subr.bf16.mxu0 0
        %982 = vmatpush1.bf16.msra.mxu0 0
        %983 = vmatprep.subr.bf16.mxu0 0
        %984 = vmatpush1.bf16.msra.mxu0 0
        %985 = vmatprep.subr.bf16.mxu0 0
        %986 = vmatpush1.bf16.msra.mxu0 0
        %987 = vmatprep.subr.bf16.mxu0 0
        %988 = vmatpush1.bf16.msra.mxu0 0
        %989 = vmatprep.subr.bf16.mxu0 0
        %990 = vmatpush1.bf16.msra.mxu0 0
        %991 = vmatprep.subr.bf16.mxu0 0
        %992 = vmatpush1.bf16.msra.mxu0 0
        %993 = vmatprep.subr.bf16.mxu0 0
        %994 = vmatpush1.bf16.msra.mxu0 0
        %995 = vmatprep.subr.bf16.mxu0 0
        %996 = vmatpush1.bf16.msra.mxu0 0
        %997 = vmatprep.subr.bf16.mxu0 0
        %998 = vmatpush1.bf16.msra.mxu0 0
        %999 = vmatprep.mubr.bf16.mxu0 0
        %1000 = vmatmul.mubr.bf16.gmra.mrb[0].mxu0 %v961
        %v1001 = vpop.f32.mrb[0].mxu0
        %v1002 = vadd.f32 0.0, %v1001
        %v1003 = vpop.f32.mrb[0].mxu0
        %v1004 = vpop.f32.mrb[0].mxu0
        %v1005 = vpop.f32.mrb[0].mxu0
        %1006 = vdwg.mxu0
        %v1007 = vld [vmem:[#allocation2] sm:$0xff]
        %v1008 = vpack.c.bf16 %v1002, %v1002
        %v1009 = vld [vmem:[#allocation21] sm:$0xf]
        %v1011 = vsel %vm894, %v1008, 0
        %v1014 = vsel %vm963, %v1009, 0
        %1016 = vmatprep.subr.bf16.mxu0 0
        %1017 = vmatpush1.bf16.msra.mxu0 %v1014
        %1018 = vmatprep.subr.bf16.mxu0 0
        %1019 = vmatpush1.bf16.msra.mxu0 0
        %1020 = vmatprep.subr.bf16.mxu0 0
        %1021 = vmatpush1.bf16.msra.mxu0 0
        %1022 = vmatprep.subr.bf16.mxu0 0
        %1023 = vmatpush1.bf16.msra.mxu0 0
        %1024 = vmatprep.subr.bf16.mxu0 0
        %1025 = vmatpush1.bf16.msra.mxu0 0
        %1026 = vmatprep.subr.bf16.mxu0 0
        %1027 = vmatpush1.bf16.msra.mxu0 0
        %1028 = vmatprep.subr.bf16.mxu0 0
        %1029 = vmatpush1.bf16.msra.mxu0 0
        %1030 = vmatprep.subr.bf16.mxu0 0
        %1031 = vmatpush1.bf16.msra.mxu0 0
        %1032 = vmatprep.subr.bf16.mxu0 0
        %1033 = vmatpush1.bf16.msra.mxu0 0
        %1034 = vmatprep.subr.bf16.mxu0 0
        %1035 = vmatpush1.bf16.msra.mxu0 0
        %1036 = vmatprep.subr.bf16.mxu0 0
        %1037 = vmatpush1.bf16.msra.mxu0 0
        %1038 = vmatprep.subr.bf16.mxu0 0
        %1039 = vmatpush1.bf16.msra.mxu0 0
        %1040 = vmatprep.subr.bf16.mxu0 0
        %1041 = vmatpush1.bf16.msra.mxu0 0
        %1042 = vmatprep.subr.bf16.mxu0 0
        %1043 = vmatpush1.bf16.msra.mxu0 0
        %1044 = vmatprep.subr.bf16.mxu0 0
        %1045 = vmatpush1.bf16.msra.mxu0 0
        %1046 = vmatprep.subr.bf16.mxu0 0
        %1047 = vmatpush1.bf16.msra.mxu0 0
        %1048 = vmatprep.mubr.bf16.mxu0 0
        %1049 = vmatmul.mubr.bf16.gmra.mrb[0].mxu0 %v1011
        %v1050 = vpop.f32.mrb[0].mxu0
        %v1051 = vadd.f32 0.0, %v1050
        %v1052 = vpop.f32.mrb[0].mxu0
        %v1053 = vpop.f32.mrb[0].mxu0
        %v1054 = vpop.f32.mrb[0].mxu0
        %1055 = vdwg.mxu0
        %v1056 = vadd.f32 %v1007, %v1051
        %1057 = vst.msk [vmem:[#allocation2] sm:$0xff] %vm716, %v1056
        %1059 = vrot.lane.b32.xlu0 %v896, 120
        %v1060 = vpop.permute.xlu0 %1059
        %1062 = vrot.lane.b32.xlu0 %v897, 120
        %v1063 = vpop.permute.xlu0 %1062
        %v1065 = vsel %vm894, %v1060, 0
        %v1068 = vsel %vm894, %v1063, 0
        %1070 = vmatprep.subr.bf16.mxu0 0
        %1071 = vmatpush1.bf16.xpose.msra.mxu0 %v1068
        %1072 = vmatprep.subr.bf16.mxu0 0
        %1073 = vmatpush1.bf16.xpose.msra.mxu0 0
        %1074 = vmatprep.subr.bf16.mxu0 0
        %1075 = vmatpush1.bf16.xpose.msra.mxu0 0
        %1076 = vmatprep.subr.bf16.mxu0 0
        %1077 = vmatpush1.bf16.xpose.msra.mxu0 0
        %1078 = vmatprep.subr.bf16.mxu0 0
        %1079 = vmatpush1.bf16.xpose.msra.mxu0 0
        %1080 = vmatprep.subr.bf16.mxu0 0
        %1081 = vmatpush1.bf16.xpose.msra.mxu0 0
        %1082 = vmatprep.subr.bf16.mxu0 0
        %1083 = vmatpush1.bf16.xpose.msra.mxu0 0
        %1084 = vmatprep.subr.bf16.mxu0 0
        %1085 = vmatpush1.bf16.xpose.msra.mxu0 0
        %1086 = vmatprep.subr.bf16.mxu0 0
        %1087 = vmatpush1.bf16.xpose.msra.mxu0 0
        %1088 = vmatprep.subr.bf16.mxu0 0
        %1089 = vmatpush1.bf16.xpose.msra.mxu0 0
        %1090 = vmatprep.subr.bf16.mxu0 0
        %1091 = vmatpush1.bf16.xpose.msra.mxu0 0
        %1092 = vmatprep.subr.bf16.mxu0 0
        %1093 = vmatpush1.bf16.xpose.msra.mxu0 0
        %1094 = vmatprep.subr.bf16.mxu0 0
        %1095 = vmatpush1.bf16.xpose.msra.mxu0 0
        %1096 = vmatprep.subr.bf16.mxu0 0
        %1097 = vmatpush1.bf16.xpose.msra.mxu0 0
        %1098 = vmatprep.subr.bf16.mxu0 0
        %1099 = vmatpush1.bf16.xpose.msra.mxu0 0
        %1100 = vmatprep.subr.bf16.mxu0 0
        %1101 = vmatpush1.bf16.xpose.msra.mxu0 0
        %1102 = vmatprep.mubr.bf16.mxu0 0
        %1103 = vmatmul.mubr.bf16.gmra.mrb[0].mxu0 %v1065
        %v1104 = vpop.f32.mrb[0].mxu0
        %v1105 = vadd.f32 %v692, %v1104
        %v1106 = vpop.f32.mrb[0].mxu0
        %v1107 = vpop.f32.mrb[0].mxu0
        %v1108 = vpop.f32.mrb[0].mxu0
        %1109 = vdwg.mxu0
        %v1110 = vsel %vm894, %v1105, -inf
        %1111 = vmax.xlane.f32.xlu0 %v1110
        %v1112 = vpop.xlane.xlu0 %1111
        %v1113 = vsub.f32 %v1105, %v1112
        %v1114 = vmul.f32 %v1113, 1.442695
        %v1115 = vpow.pop %v1114
        %v1116 = vsel %vm894, %v1115, 0.0
        %1117 = vadd.xlane.f32.xlu0 %v1116
        %v1118 = vpop.xlane.xlu0 %1117
        %v1119 = vrcp.pop %v1118
        %v1120 = vmul.f32 %v1115, %v1119
        %v1121 = vld [vmem:[#allocation3] sm:$0xff]
        %v1122 = vadd.f32 %v1121, %v1120
        %1123 = vst.msk [vmem:[#allocation3] sm:$0xff] %vm894, %v1122
        %v1124 = vpack.c.bf16 %v1120, %v1120
        %1126 = vrot.lane.b32.xlu0 %v898, 120
        %v1127 = vpop.permute.xlu0 %1126
        %v1129 = vsel %vm894, %v1124, 0
        %v1132 = vsel %vm963, %v1127, 0
        %1134 = vmatprep.subr.bf16.mxu0 0
        %1135 = vmatpush1.bf16.msra.mxu0 %v1132
        %1136 = vmatprep.subr.bf16.mxu0 0
        %1137 = vmatpush1.bf16.msra.mxu0 0
        %1138 = vmatprep.subr.bf16.mxu0 0
        %1139 = vmatpush1.bf16.msra.mxu0 0
        %1140 = vmatprep.subr.bf16.mxu0 0
        %1141 = vmatpush1.bf16.msra.mxu0 0
        %1142 = vmatprep.subr.bf16.mxu0 0
        %1143 = vmatpush1.bf16.msra.mxu0 0
        %1144 = vmatprep.subr.bf16.mxu0 0
        %1145 = vmatpush1.bf16.msra.mxu0 0
        %1146 = vmatprep.subr.bf16.mxu0 0
        %1147 = vmatpush1.bf16.msra.mxu0 0
        %1148 = vmatprep.subr.bf16.mxu0 0
        %1149 = vmatpush1.bf16.msra.mxu0 0
        %1150 = vmatprep.subr.bf16.mxu0 0
        %1151 = vmatpush1.bf16.msra.mxu0 0
        %1152 = vmatprep.subr.bf16.mxu0 0
        %1153 = vmatpush1.bf16.msra.mxu0 0
        %1154 = vmatprep.subr.bf16.mxu0 0
        %1155 = vmatpush1.bf16.msra.mxu0 0
        %1156 = vmatprep.subr.bf16.mxu0 0
        %1157 = vmatpush1.bf16.msra.mxu0 0
        %1158 = vmatprep.subr.bf16.mxu0 0
        %1159 = vmatpush1.bf16.msra.mxu0 0
        %1160 = vmatprep.subr.bf16.mxu0 0
        %1161 = vmatpush1.bf16.msra.mxu0 0
        %1162 = vmatprep.subr.bf16.mxu0 0
        %1163 = vmatpush1.bf16.msra.mxu0 0
        %1164 = vmatprep.subr.bf16.mxu0 0
        %1165 = vmatpush1.bf16.msra.mxu0 0
        %1166 = vmatprep.mubr.bf16.mxu0 0
        %1167 = vmatmul.mubr.bf16.gmra.mrb[0].mxu0 %v1129
        %v1168 = vpop.f32.mrb[0].mxu0
        %v1169 = vadd.f32 0.0, %v1168
        %v1170 = vpop.f32.mrb[0].mxu0
        %v1171 = vpop.f32.mrb[0].mxu0
        %v1172 = vpop.f32.mrb[0].mxu0
        %1173 = vdwg.mxu0
        %v1174 = vld [vmem:[#allocation2] sm:$0xff]
        %v1175 = vpack.c.bf16 %v1169, %v1169
        %s1176 = scalar_lea.vmem [#allocation21], 4
        %v1177 = vld [vmem:[%s1176] sm:$0xf]
        %v1179 = vsel %vm894, %v1175, 0
        %v1182 = vsel %vm963, %v1177, 0
        %1184 = vmatprep.subr.bf16.mxu0 0
        %1185 = vmatpush1.bf16.msra.mxu0 %v1182
        %1186 = vmatprep.subr.bf16.mxu0 0
        %1187 = vmatpush1.bf16.msra.mxu0 0
        %1188 = vmatprep.subr.bf16.mxu0 0
        %1189 = vmatpush1.bf16.msra.mxu0 0
        %1190 = vmatprep.subr.bf16.mxu0 0
        %1191 = vmatpush1.bf16.msra.mxu0 0
        %1192 = vmatprep.subr.bf16.mxu0 0
        %1193 = vmatpush1.bf16.msra.mxu0 0
        %1194 = vmatprep.subr.bf16.mxu0 0
        %1195 = vmatpush1.bf16.msra.mxu0 0
        %1196 = vmatprep.subr.bf16.mxu0 0
        %1197 = vmatpush1.bf16.msra.mxu0 0
        %1198 = vmatprep.subr.bf16.mxu0 0
        %1199 = vmatpush1.bf16.msra.mxu0 0
        %1200 = vmatprep.subr.bf16.mxu0 0
        %1201 = vmatpush1.bf16.msra.mxu0 0
        %1202 = vmatprep.subr.bf16.mxu0 0
        %1203 = vmatpush1.bf16.msra.mxu0 0
        %1204 = vmatprep.subr.bf16.mxu0 0
        %1205 = vmatpush1.bf16.msra.mxu0 0
        %1206 = vmatprep.subr.bf16.mxu0 0
        %1207 = vmatpush1.bf16.msra.mxu0 0
        %1208 = vmatprep.subr.bf16.mxu0 0
        %1209 = vmatpush1.bf16.msra.mxu0 0
        %1210 = vmatprep.subr.bf16.mxu0 0
        %1211 = vmatpush1.bf16.msra.mxu0 0
        %1212 = vmatprep.subr.bf16.mxu0 0
        %1213 = vmatpush1.bf16.msra.mxu0 0
        %1214 = vmatprep.subr.bf16.mxu0 0
        %1215 = vmatpush1.bf16.msra.mxu0 0
        %1216 = vmatprep.mubr.bf16.mxu0 0
        %1217 = vmatmul.mubr.bf16.gmra.mrb[0].mxu0 %v1179
        %v1218 = vpop.f32.mrb[0].mxu0
        %v1219 = vadd.f32 0.0, %v1218
        %v1220 = vpop.f32.mrb[0].mxu0
        %v1221 = vpop.f32.mrb[0].mxu0
        %v1222 = vpop.f32.mrb[0].mxu0
        %1223 = vdwg.mxu0
        %v1224 = vadd.f32 %v1174, %v1219
        %1225 = vst.msk [vmem:[#allocation2] sm:$0xff] %vm716, %v1224
        %1226 = vrot.lane.b32.xlu0 %v896, 112
        %v1227 = vpop.permute.xlu0 %1226
        %1228 = vrot.lane.b32.xlu0 %v897, 112
        %v1229 = vpop.permute.xlu0 %1228
        %v1231 = vsel %vm894, %v1227, 0
        %v1234 = vsel %vm894, %v1229, 0
        %1236 = vmatprep.subr.bf16.mxu0 0
        %1237 = vmatpush1.bf16.xpose.msra.mxu0 %v1234
        %1238 = vmatprep.subr.bf16.mxu0 0
        %1239 = vmatpush1.bf16.xpose.msra.mxu0 0
        %1240 = vmatprep.subr.bf16.mxu0 0
        %1241 = vmatpush1.bf16.xpose.msra.mxu0 0
        %1242 = vmatprep.subr.bf16.mxu0 0
        %1243 = vmatpush1.bf16.xpose.msra.mxu0 0
        %1244 = vmatprep.subr.bf16.mxu0 0
        %1245 = vmatpush1.bf16.xpose.msra.mxu0 0
        %1246 = vmatprep.subr.bf16.mxu0 0
        %1247 = vmatpush1.bf16.xpose.msra.mxu0 0
        %1248 = vmatprep.subr.bf16.mxu0 0
        %1249 = vmatpush1.bf16.xpose.msra.mxu0 0
        %1250 = vmatprep.subr.bf16.mxu0 0
        %1251 = vmatpush1.bf16.xpose.msra.mxu0 0
        %1252 = vmatprep.subr.bf16.mxu0 0
        %1253 = vmatpush1.bf16.xpose.msra.mxu0 0
        %1254 = vmatprep.subr.bf16.mxu0 0
        %1255 = vmatpush1.bf16.xpose.msra.mxu0 0
        %1256 = vmatprep.subr.bf16.mxu0 0
        %1257 = vmatpush1.bf16.xpose.msra.mxu0 0
        %1258 = vmatprep.subr.bf16.mxu0 0
        %1259 = vmatpush1.bf16.xpose.msra.mxu0 0
        %1260 = vmatprep.subr.bf16.mxu0 0
        %1261 = vmatpush1.bf16.xpose.msra.mxu0 0
        %1262 = vmatprep.subr.bf16.mxu0 0
        %1263 = vmatpush1.bf16.xpose.msra.mxu0 0
        %1264 = vmatprep.subr.bf16.mxu0 0
        %1265 = vmatpush1.bf16.xpose.msra.mxu0 0
        %1266 = vmatprep.subr.bf16.mxu0 0
        %1267 = vmatpush1.bf16.xpose.msra.mxu0 0
        %1268 = vmatprep.mubr.bf16.mxu0 0
        %1269 = vmatmul.mubr.bf16.gmra.mrb[0].mxu0 %v1231
        %v1270 = vpop.f32.mrb[0].mxu0
        %v1271 = vadd.f32 %v692, %v1270
        %v1272 = vpop.f32.mrb[0].mxu0
        %v1273 = vpop.f32.mrb[0].mxu0
        %v1274 = vpop.f32.mrb[0].mxu0
        %1275 = vdwg.mxu0
        %v1276 = vsel %vm894, %v1271, -inf
        %1277 = vmax.xlane.f32.xlu0 %v1276
        %v1278 = vpop.xlane.xlu0 %1277
        %v1279 = vsub.f32 %v1271, %v1278
        %v1280 = vmul.f32 %v1279, 1.442695
        %v1281 = vpow.pop %v1280
        %v1282 = vsel %vm894, %v1281, 0.0
        %1283 = vadd.xlane.f32.xlu0 %v1282
        %v1284 = vpop.xlane.xlu0 %1283
        %v1285 = vrcp.pop %v1284
        %v1286 = vmul.f32 %v1281, %v1285
        %v1287 = vld [vmem:[#allocation3] sm:$0xff]
        %v1288 = vadd.f32 %v1287, %v1286
        %1289 = vst.msk [vmem:[#allocation3] sm:$0xff] %vm894, %v1288
        %v1290 = vpack.c.bf16 %v1286, %v1286
        %1291 = vrot.lane.b32.xlu0 %v898, 112
        %v1292 = vpop.permute.xlu0 %1291
        %v1294 = vsel %vm894, %v1290, 0
        %v1297 = vsel %vm963, %v1292, 0
        %1299 = vmatprep.subr.bf16.mxu0 0
        %1300 = vmatpush1.bf16.msra.mxu0 %v1297
        %1301 = vmatprep.subr.bf16.mxu0 0
        %1302 = vmatpush1.bf16.msra.mxu0 0
        %1303 = vmatprep.subr.bf16.mxu0 0
        %1304 = vmatpush1.bf16.msra.mxu0 0
        %1305 = vmatprep.subr.bf16.mxu0 0
        %1306 = vmatpush1.bf16.msra.mxu0 0
        %1307 = vmatprep.subr.bf16.mxu0 0
        %1308 = vmatpush1.bf16.msra.mxu0 0
        %1309 = vmatprep.subr.bf16.mxu0 0
        %1310 = vmatpush1.bf16.msra.mxu0 0
        %1311 = vmatprep.subr.bf16.mxu0 0
        %1312 = vmatpush1.bf16.msra.mxu0 0
        %1313 = vmatprep.subr.bf16.mxu0 0
        %1314 = vmatpush1.bf16.msra.mxu0 0
        %1315 = vmatprep.subr.bf16.mxu0 0
        %1316 = vmatpush1.bf16.msra.mxu0 0
        %1317 = vmatprep.subr.bf16.mxu0 0
        %1318 = vmatpush1.bf16.msra.mxu0 0
        %1319 = vmatprep.subr.bf16.mxu0 0
        %1320 = vmatpush1.bf16.msra.mxu0 0
        %1321 = vmatprep.subr.bf16.mxu0 0
        %1322 = vmatpush1.bf16.msra.mxu0 0
        %1323 = vmatprep.subr.bf16.mxu0 0
        %1324 = vmatpush1.bf16.msra.mxu0 0
        %1325 = vmatprep.subr.bf16.mxu0 0
        %1326 = vmatpush1.bf16.msra.mxu0 0
        %1327 = vmatprep.subr.bf16.mxu0 0
        %1328 = vmatpush1.bf16.msra.mxu0 0
        %1329 = vmatprep.subr.bf16.mxu0 0
        %1330 = vmatpush1.bf16.msra.mxu0 0
        %1331 = vmatprep.mubr.bf16.mxu0 0
        %1332 = vmatmul.mubr.bf16.gmra.mrb[0].mxu0 %v1294
        %v1333 = vpop.f32.mrb[0].mxu0
        %v1334 = vadd.f32 0.0, %v1333
        %v1335 = vpop.f32.mrb[0].mxu0
        %v1336 = vpop.f32.mrb[0].mxu0
        %v1337 = vpop.f32.mrb[0].mxu0
        %1338 = vdwg.mxu0
        %v1339 = vld [vmem:[#allocation2] sm:$0xff]
        %v1340 = vpack.c.bf16 %v1334, %v1334
        %s1341 = scalar_lea.vmem [#allocation21], 8
        %v1342 = vld [vmem:[%s1341] sm:$0xf]
        %v1344 = vsel %vm894, %v1340, 0
        %v1347 = vsel %vm963, %v1342, 0
        %1349 = vmatprep.subr.bf16.mxu0 0
        %1350 = vmatpush1.bf16.msra.mxu0 %v1347
        %1351 = vmatprep.subr.bf16.mxu0 0
        %1352 = vmatpush1.bf16.msra.mxu0 0
        %1353 = vmatprep.subr.bf16.mxu0 0
        %1354 = vmatpush1.bf16.msra.mxu0 0
        %1355 = vmatprep.subr.bf16.mxu0 0
        %1356 = vmatpush1.bf16.msra.mxu0 0
        %1357 = vmatprep.subr.bf16.mxu0 0
        %1358 = vmatpush1.bf16.msra.mxu0 0
        %1359 = vmatprep.subr.bf16.mxu0 0
        %1360 = vmatpush1.bf16.msra.mxu0 0
        %1361 = vmatprep.subr.bf16.mxu0 0
        %1362 = vmatpush1.bf16.msra.mxu0 0
        %1363 = vmatprep.subr.bf16.mxu0 0
        %1364 = vmatpush1.bf16.msra.mxu0 0
        %1365 = vmatprep.subr.bf16.mxu0 0
        %1366 = vmatpush1.bf16.msra.mxu0 0
        %1367 = vmatprep.subr.bf16.mxu0 0
        %1368 = vmatpush1.bf16.msra.mxu0 0
        %1369 = vmatprep.subr.bf16.mxu0 0
        %1370 = vmatpush1.bf16.msra.mxu0 0
        %1371 = vmatprep.subr.bf16.mxu0 0
        %1372 = vmatpush1.bf16.msra.mxu0 0
        %1373 = vmatprep.subr.bf16.mxu0 0
        %1374 = vmatpush1.bf16.msra.mxu0 0
        %1375 = vmatprep.subr.bf16.mxu0 0
        %1376 = vmatpush1.bf16.msra.mxu0 0
        %1377 = vmatprep.subr.bf16.mxu0 0
        %1378 = vmatpush1.bf16.msra.mxu0 0
        %1379 = vmatprep.subr.bf16.mxu0 0
        %1380 = vmatpush1.bf16.msra.mxu0 0
        %1381 = vmatprep.mubr.bf16.mxu0 0
        %1382 = vmatmul.mubr.bf16.gmra.mrb[0].mxu0 %v1344
        %v1383 = vpop.f32.mrb[0].mxu0
        %v1384 = vadd.f32 0.0, %v1383
        %v1385 = vpop.f32.mrb[0].mxu0
        %v1386 = vpop.f32.mrb[0].mxu0
        %v1387 = vpop.f32.mrb[0].mxu0
        %1388 = vdwg.mxu0
        %v1389 = vadd.f32 %v1339, %v1384
        %1390 = vst.msk [vmem:[#allocation2] sm:$0xff] %vm716, %v1389
        %1391 = vrot.lane.b32.xlu0 %v896, 104
        %v1392 = vpop.permute.xlu0 %1391
        %1393 = vrot.lane.b32.xlu0 %v897, 104
        %v1394 = vpop.permute.xlu0 %1393
        %v1396 = vsel %vm894, %v1392, 0
        %v1399 = vsel %vm894, %v1394, 0
        %1401 = vmatprep.subr.bf16.mxu0 0
        %1402 = vmatpush1.bf16.xpose.msra.mxu0 %v1399
        %1403 = vmatprep.subr.bf16.mxu0 0
        %1404 = vmatpush1.bf16.xpose.msra.mxu0 0
        %1405 = vmatprep.subr.bf16.mxu0 0
        %1406 = vmatpush1.bf16.xpose.msra.mxu0 0
        %1407 = vmatprep.subr.bf16.mxu0 0
        %1408 = vmatpush1.bf16.xpose.msra.mxu0 0
        %1409 = vmatprep.subr.bf16.mxu0 0
        %1410 = vmatpush1.bf16.xpose.msra.mxu0 0
        %1411 = vmatprep.subr.bf16.mxu0 0
        %1412 = vmatpush1.bf16.xpose.msra.mxu0 0
        %1413 = vmatprep.subr.bf16.mxu0 0
        %1414 = vmatpush1.bf16.xpose.msra.mxu0 0
        %1415 = vmatprep.subr.bf16.mxu0 0
        %1416 = vmatpush1.bf16.xpose.msra.mxu0 0
        %1417 = vmatprep.subr.bf16.mxu0 0
        %1418 = vmatpush1.bf16.xpose.msra.mxu0 0
        %1419 = vmatprep.subr.bf16.mxu0 0
        %1420 = vmatpush1.bf16.xpose.msra.mxu0 0
        %1421 = vmatprep.subr.bf16.mxu0 0
        %1422 = vmatpush1.bf16.xpose.msra.mxu0 0
        %1423 = vmatprep.subr.bf16.mxu0 0
        %1424 = vmatpush1.bf16.xpose.msra.mxu0 0
        %1425 = vmatprep.subr.bf16.mxu0 0
        %1426 = vmatpush1.bf16.xpose.msra.mxu0 0
        %1427 = vmatprep.subr.bf16.mxu0 0
        %1428 = vmatpush1.bf16.xpose.msra.mxu0 0
        %1429 = vmatprep.subr.bf16.mxu0 0
        %1430 = vmatpush1.bf16.xpose.msra.mxu0 0
        %1431 = vmatprep.subr.bf16.mxu0 0
        %1432 = vmatpush1.bf16.xpose.msra.mxu0 0
        %1433 = vmatprep.mubr.bf16.mxu0 0
        %1434 = vmatmul.mubr.bf16.gmra.mrb[0].mxu0 %v1396
        %v1435 = vpop.f32.mrb[0].mxu0
        %v1436 = vadd.f32 %v692, %v1435
        %v1437 = vpop.f32.mrb[0].mxu0
        %v1438 = vpop.f32.mrb[0].mxu0
        %v1439 = vpop.f32.mrb[0].mxu0
        %1440 = vdwg.mxu0
        %v1441 = vsel %vm894, %v1436, -inf
        %1442 = vmax.xlane.f32.xlu0 %v1441
        %v1443 = vpop.xlane.xlu0 %1442
        %v1444 = vsub.f32 %v1436, %v1443
        %v1445 = vmul.f32 %v1444, 1.442695
        %v1446 = vpow.pop %v1445
        %v1447 = vsel %vm894, %v1446, 0.0
        %1448 = vadd.xlane.f32.xlu0 %v1447
        %v1449 = vpop.xlane.xlu0 %1448
        %v1450 = vrcp.pop %v1449
        %v1451 = vmul.f32 %v1446, %v1450
        %v1452 = vld [vmem:[#allocation3] sm:$0xff]
        %v1453 = vadd.f32 %v1452, %v1451
        %1454 = vst.msk [vmem:[#allocation3] sm:$0xff] %vm894, %v1453
        %v1455 = vpack.c.bf16 %v1451, %v1451
        %1456 = vrot.lane.b32.xlu0 %v898, 104
        %v1457 = vpop.permute.xlu0 %1456
        %v1459 = vsel %vm894, %v1455, 0
        %v1462 = vsel %vm963, %v1457, 0
        %1464 = vmatprep.subr.bf16.mxu0 0
        %1465 = vmatpush1.bf16.msra.mxu0 %v1462
        %1466 = vmatprep.subr.bf16.mxu0 0
        %1467 = vmatpush1.bf16.msra.mxu0 0
        %1468 = vmatprep.subr.bf16.mxu0 0
        %1469 = vmatpush1.bf16.msra.mxu0 0
        %1470 = vmatprep.subr.bf16.mxu0 0
        %1471 = vmatpush1.bf16.msra.mxu0 0
        %1472 = vmatprep.subr.bf16.mxu0 0
        %1473 = vmatpush1.bf16.msra.mxu0 0
        %1474 = vmatprep.subr.bf16.mxu0 0
        %1475 = vmatpush1.bf16.msra.mxu0 0
        %1476 = vmatprep.subr.bf16.mxu0 0
        %1477 = vmatpush1.bf16.msra.mxu0 0
        %1478 = vmatprep.subr.bf16.mxu0 0
        %1479 = vmatpush1.bf16.msra.mxu0 0
        %1480 = vmatprep.subr.bf16.mxu0 0
        %1481 = vmatpush1.bf16.msra.mxu0 0
        %1482 = vmatprep.subr.bf16.mxu0 0
        %1483 = vmatpush1.bf16.msra.mxu0 0
        %1484 = vmatprep.subr.bf16.mxu0 0
        %1485 = vmatpush1.bf16.msra.mxu0 0
        %1486 = vmatprep.subr.bf16.mxu0 0
        %1487 = vmatpush1.bf16.msra.mxu0 0
        %1488 = vmatprep.subr.bf16.mxu0 0
        %1489 = vmatpush1.bf16.msra.mxu0 0
        %1490 = vmatprep.subr.bf16.mxu0 0
        %1491 = vmatpush1.bf16.msra.mxu0 0
        %1492 = vmatprep.subr.bf16.mxu0 0
        %1493 = vmatpush1.bf16.msra.mxu0 0
        %1494 = vmatprep.subr.bf16.mxu0 0
        %1495 = vmatpush1.bf16.msra.mxu0 0
        %1496 = vmatprep.mubr.bf16.mxu0 0
        %1497 = vmatmul.mubr.bf16.gmra.mrb[0].mxu0 %v1459
        %v1498 = vpop.f32.mrb[0].mxu0
        %v1499 = vadd.f32 0.0, %v1498
        %v1500 = vpop.f32.mrb[0].mxu0
        %v1501 = vpop.f32.mrb[0].mxu0
        %v1502 = vpop.f32.mrb[0].mxu0
        %1503 = vdwg.mxu0
        %v1504 = vld [vmem:[#allocation2] sm:$0xff]
        %v1505 = vpack.c.bf16 %v1499, %v1499
        %s1506 = scalar_lea.vmem [#allocation21], 12
        %v1507 = vld [vmem:[%s1506] sm:$0xf]
        %v1509 = vsel %vm894, %v1505, 0
        %v1512 = vsel %vm963, %v1507, 0
        %1514 = vmatprep.subr.bf16.mxu0 0
        %1515 = vmatpush1.bf16.msra.mxu0 %v1512
        %1516 = vmatprep.subr.bf16.mxu0 0
        %1517 = vmatpush1.bf16.msra.mxu0 0
        %1518 = vmatprep.subr.bf16.mxu0 0
        %1519 = vmatpush1.bf16.msra.mxu0 0
        %1520 = vmatprep.subr.bf16.mxu0 0
        %1521 = vmatpush1.bf16.msra.mxu0 0
        %1522 = vmatprep.subr.bf16.mxu0 0
        %1523 = vmatpush1.bf16.msra.mxu0 0
        %1524 = vmatprep.subr.bf16.mxu0 0
        %1525 = vmatpush1.bf16.msra.mxu0 0
        %1526 = vmatprep.subr.bf16.mxu0 0
        %1527 = vmatpush1.bf16.msra.mxu0 0
        %1528 = vmatprep.subr.bf16.mxu0 0
        %1529 = vmatpush1.bf16.msra.mxu0 0
        %1530 = vmatprep.subr.bf16.mxu0 0
        %1531 = vmatpush1.bf16.msra.mxu0 0
        %1532 = vmatprep.subr.bf16.mxu0 0
        %1533 = vmatpush1.bf16.msra.mxu0 0
        %1534 = vmatprep.subr.bf16.mxu0 0
        %1535 = vmatpush1.bf16.msra.mxu0 0
        %1536 = vmatprep.subr.bf16.mxu0 0
        %1537 = vmatpush1.bf16.msra.mxu0 0
        %1538 = vmatprep.subr.bf16.mxu0 0
        %1539 = vmatpush1.bf16.msra.mxu0 0
        %1540 = vmatprep.subr.bf16.mxu0 0
        %1541 = vmatpush1.bf16.msra.mxu0 0
        %1542 = vmatprep.subr.bf16.mxu0 0
        %1543 = vmatpush1.bf16.msra.mxu0 0
        %1544 = vmatprep.subr.bf16.mxu0 0
        %1545 = vmatpush1.bf16.msra.mxu0 0
        %1546 = vmatprep.mubr.bf16.mxu0 0
        %1547 = vmatmul.mubr.bf16.gmra.mrb[0].mxu0 %v1509
        %v1548 = vpop.f32.mrb[0].mxu0
        %v1549 = vadd.f32 0.0, %v1548
        %v1550 = vpop.f32.mrb[0].mxu0
        %v1551 = vpop.f32.mrb[0].mxu0
        %v1552 = vpop.f32.mrb[0].mxu0
        %1553 = vdwg.mxu0
        %v1554 = vadd.f32 %v1504, %v1549
        %1555 = vst.msk [vmem:[#allocation2] sm:$0xff] %vm716, %v1554
        %v1556 = vld [vmem:[#allocation2] sm:$0xff]
        %v1557 = vld [vmem:[#allocation22] sm:$0x1]
        %v1559 = vlaneseq
        %v1560 = vshrl.u32 %v1559, 7
        %v1561 = vsub.s32 0, %v1560
        %v1562 = vrot.slane %v1557, %v1561
        %v1564 = vadd.f32 %v1556, %v1562
        %1565 = vst.msk [vmem:[%s677] sm:$0xff] %vm716, %v1564
        %v1566 = vld [vmem:[#allocation3] sm:$0xff]
        %v1567 = vmul.f32 %v1566, 0.25
        %1568 = vst.msk [vmem:[%s684] sm:$0xff] %vm894, %v1567
        %s1569 = sand.u32 %s338, 1
        %s1570 = scalar_lea.sflag [#allocation6], %s1569
        %s1571 = sand.u32 %s338, 1
        %s1572 = smul.addr %s1571, 8
        %s1573 = scalar_lea.vmem [#allocation24], %s1572
        %s1574 = sand.u32 %s366, 1
        %s1575 = scalar_lea.sflag [#allocation26], %s1574
        %s1576 = sand.u32 %s366, 1
        %s1577 = smul.addr %s1576, 8
        %s1578 = scalar_lea.vmem [#allocation25], %s1577
        // Predicated region
        $region117: #{tpu_custom_call.1} parent=67 // pred_check
          %p1579 = pneg %p348
        $region118: #{tpu_custom_call.1} parent=67 // pred_check_branch
          %1581 = sbr.rel (%p1579) target = $region120
        $region119: #{tpu_custom_call.1} parent=67 // pred_region
          %s1583 = ssub.s32 128, 128
          %1584 = vsyncadd %s1570, %s1583
          %s1585 = sadd.s32 %s47, %s46
          %s1586 = smul.addr %s1585, 128
          %s1587 = scalar_lea.hbm %s12, %s1586
          %s1589 = sshll.u32 %s1573, 4
          %s1590 = int_to_ptr.vmem [resolvable:$true] %s1589
          %1592 = dma.vmem_to_hbm [thread:$0]  %s1590, 128, %s1587, %s1570
        $region120: #{tpu_custom_call.1} parent=67 // pred_fallthru
          _
        // Predicated region
        $region121: #{tpu_custom_call.1} parent=67 // pred_check
          %p1593 = pneg %p376
        $region122: #{tpu_custom_call.1} parent=67 // pred_check_branch
          %1595 = sbr.rel (%p1593) target = $region124
        $region123: #{tpu_custom_call.1} parent=67 // pred_region
          %s1597 = ssub.s32 128, 128
          %1598 = vsyncadd %s1575, %s1597
          %s1599 = sadd.s32 %s47, %s46
          %s1600 = smul.addr %s1599, 128
          %s1601 = scalar_lea.hbm %s13, %s1600
          %s1603 = sshll.u32 %s1578, 4
          %s1604 = int_to_ptr.vmem [resolvable:$true] %s1603
          %1606 = dma.vmem_to_hbm [thread:$0]  %s1604, 128, %s1601, %s1575
        $region124: #{tpu_custom_call.1} parent=67 // pred_fallthru
          _
      $region68: #{tpu_custom_call.1} parent=5 // pred_fallthru
        _
      %p1607 = scmp.le.s32.totalorder 2, %s37
      // Predicated region
      $region125: #{tpu_custom_call.1} parent=5 // pred_check
        %p1608 = pneg %p1607
      $region126: #{tpu_custom_call.1} parent=5 // pred_check_branch
        %1610 = sbr.rel (%p1608) target = $region128
      $region127: #{tpu_custom_call.1} parent=5 // pred_region
        %s1611 = ssub.s32 %s37, 2
        // Predicated region
        $region129: #{tpu_custom_call.1} parent=127 // pred_check
          %p1612 = pneg %p354
        $region130: #{tpu_custom_call.1} parent=127 // pred_check_branch
          %1614 = sbr.rel (%p1612) target = $region132
        $region131: #{tpu_custom_call.1} parent=127 // pred_region
          %s1615 = sand.u32 %s339, 1
          %s1616 = scalar_lea.sflag [#allocation6], %s1615
          %s1617 = sand.u32 %s339, 1
          %s1618 = smul.addr %s1617, 8
          %s1619 = scalar_lea.vmem [#allocation24], %s1618
          %1620 = dma.done %s1616, 128
        $region132: #{tpu_custom_call.1} parent=127 // pred_fallthru
          _
        // Predicated region
        $region133: #{tpu_custom_call.1} parent=127 // pred_check
          %p1621 = pneg %p382
        $region134: #{tpu_custom_call.1} parent=127 // pred_check_branch
          %1623 = sbr.rel (%p1621) target = $region136
        $region135: #{tpu_custom_call.1} parent=127 // pred_region
          %s1624 = sand.u32 %s367, 1
          %s1625 = scalar_lea.sflag [#allocation26], %s1624
          %s1626 = sand.u32 %s367, 1
          %s1627 = smul.addr %s1626, 8
          %s1628 = scalar_lea.vmem [#allocation25], %s1627
          %1629 = dma.done %s1625, 128
        $region136: #{tpu_custom_call.1} parent=127 // pred_fallthru
          _
      $region128: #{tpu_custom_call.1} parent=5 // pred_fallthru
        _
    $region6: #{tpu_custom_call.1} parent=1 // loop_footer
      %s41 = sadd.s32 1, %s37
    $region7: #{tpu_custom_call.1} parent=1 // loop_footer_branch
      %36 = sbr.rel target = $region3
    $region8: #{tpu_custom_call.1} parent=1 // loop_exit
      _
    %1630 = vsyncpa [#allocation5], 1
    %s1631 = scalar_lea.sflag [#allocation5], 1
    %1632 = vsyncpa %s1631, 1
    %1633 = vsyncpa [#allocation8], 1
    %s1634 = scalar_lea.sflag [#allocation8], 1
    %1635 = vsyncpa %s1634, 1
    %1636 = vsyncpa [#allocation11], 1
    %1637 = vsyncpa [#allocation14], 1
    %1638 = vsyncpa [#allocation17], 1
    %1639 = vsyncpa [#allocation20], 1
    %1640 = vsyncpa [#allocation23], 1
    %1641 = vsyncpa [#allocation6], 1
    %s1642 = scalar_lea.sflag [#allocation6], 1
    %1643 = vsyncpa %s1642, 1
    %1644 = vsyncpa [#allocation26], 1
    %s1645 = scalar_lea.sflag [#allocation26], 1
    %1646 = vsyncpa %s1645, 1

</llo_original>
